<compile_context>
chip_gen: v5e
topology: v5e:2x2
jax: 0.10.0
libtpu: 0.0.40
codegen_flags: <defaults>
</compile_context>

<pallas_src>
import jax
import jax.numpy as jnp
from jax.experimental import pallas as pl
from jax.experimental.pallas import tpu as pltpu

DYN_SPLITS = (1, 20, 4, 17)          # covid / claim / hos / vac groups -> D = 42

# Rows of the (8, 128) "vector" slab (one vreg holds every bias / 1-D parameter).
ROW_GB1, ROW_BLSTM, ROW_GB2, ROW_SIGN = 0, 1, 2, 3
ROW_BS, ROW_BL, ROW_WL2, ROW_BL2 = 4, 5, 6, 7


def _round_up(x, m):
    return (x + m - 1) // m * m


def _slab_layout(d, r, s):
    """Sublane offsets of every weight matrix inside the packed 'matrix' slab."""
    o = {}
    o['gw1'] = 0                                   # (d, 4r)  gating layer 1 (block-diag)
    o['wih'] = o['gw1'] + _round_up(d, 8)          # (d, 4r)  LSTM input projection
    o['whh'] = o['wih'] + _round_up(d, 8)          # (r, 4r)  LSTM recurrent weights
    o['gw2'] = o['whh'] + _round_up(r, 8)          # (4r, d)  gating layer 2 (block-diag)
    o['ws'] = o['gw2'] + _round_up(4 * r, 8)       # (s, r)   static embedding
    o['wl'] = o['ws'] + _round_up(s, 8)            # (r, r)   output head layer 1
    o['rows'] = o['wl'] + _round_up(r, 8)
    return o


# ---------------------------------------------------------------------------
# Fused forward kernel (grid = (), everything resident in VMEM)
# ---------------------------------------------------------------------------
def _hoist_fused_kernel(x_ref, stat_ref, mat_ref, vec_ref,        # inputs
                        y_ref, hn_ref, cn_ref,                    # outputs
                        hatt_ref):                                # VMEM scratch
    f32 = jnp.float32
    tn, d = x_ref.shape                      # (T*N, 42), time-major rows
    n, t_steps = y_ref.shape                 # (N, T)
    r = hn_ref.shape[-1]                     # rnn_dim
    s = stat_ref.shape[1]                    # static feature dim
    g4 = 4 * r
    L = _slab_layout(d, r, s)

    # ---- unpack the single-vreg vector slab (static slices: zero cost) -------
    gb1 = vec_ref[ROW_GB1:ROW_GB1 + 1, :g4]          # gating layer-1 bias   (1, 4r)
    blstm = vec_ref[ROW_BLSTM:ROW_BLSTM + 1, :g4]    # bih + bhh             (1, 4r)
    gb2 = vec_ref[ROW_GB2:ROW_GB2 + 1, :d]           # gating layer-2 bias   (1, d)
    sign = vec_ref[ROW_SIGN:ROW_SIGN + 1, :d]        # +1 / -1 ("-vac")      (1, d)
    bs = vec_ref[ROW_BS:ROW_BS + 1, :r]              # static_fc bias        (1, r)
    bl = vec_ref[ROW_BL:ROW_BL + 1, :r]              # linear bias           (1, r)
    wl2 = vec_ref[ROW_WL2:ROW_WL2 + 1, :r]           # linear_2 weight row   (1, r)
    bl2 = vec_ref[ROW_BL2:ROW_BL2 + 1, :1]           # linear_2 bias         (1, 1)

    # ---- static embedding: se = leaky_relu(stat @ Ws + bs) -------------------
    ws = mat_ref[L['ws']:L['ws'] + s, :r]
    se = jax.nn.leaky_relu(
        jnp.dot(stat_ref[...], ws, preferred_element_type=f32) + bs)   # (N, r)

    # Pairwise "dist" attention: the reference repeats h[i] along the neighbor
    # axis, so its aggregation is h + h * rowsum(softmax(...)) == 2 * h exactly.
    # The whole pairwise / geo block (W_pop, a_pop, ..., geo) cannot influence
    # the output and is folded into this constant (perf-review item, verified
    # against a literal transcription of the PyTorch formula in __main__).
    att_scale = 2.0

    # ---- block-diagonal gating MLPs over all T*N rows ------------------------
    x = x_ref[...]                                                      # (T*N, d)
    gw1 = mat_ref[L['gw1']:L['gw1'] + d, :g4]
    gw2 = mat_ref[L['gw2']:L['gw2'] + g4, :d]
    hid = jax.nn.leaky_relu(
        jnp.dot(x, gw1, preferred_element_type=f32) + gb1)              # (T*N, 4r)
    gate = jax.nn.sigmoid(
        jnp.dot(hid, gw2, preferred_element_type=f32) + gb2)            # (T*N, d)
    gated = sign * gate * x                                             # total_weights * dynamic

    # ---- LSTM: input projection hoisted out of the recurrence ----------------
    wih = mat_ref[L['wih']:L['wih'] + d, :g4]
    gates_x = jnp.dot(gated, wih, preferred_element_type=f32) + blstm   # (T*N, 4r)

    # TODO(synk): on v7x the (r,4r) Whh could be held in the MXU across all T
    # steps via pltpu.matmul_push_rhs / matmul_acc_lhs / matmul_pop; jnp.dot is
    # kept here for portable, robust lowering across v5e/v6e/v7x.
    whh = mat_ref[L['whh']:L['whh'] + r, :g4]
    h = jnp.zeros((n, r), f32)                  # reference's h0 is dead code; the
    c = jnp.zeros((n, r), f32)                  # LSTM runs from zero state.
    for t in range(t_steps):                    # static & tiny -> fully unrolled
        g = gates_x[t * n:(t + 1) * n, :] + jnp.dot(
            h, whh, preferred_element_type=f32)                         # (N, 4r)
        i_g = jax.nn.sigmoid(g[:, 0 * r:1 * r])  # PyTorch LSTM gate order: i,f,g,o
        f_g = jax.nn.sigmoid(g[:, 1 * r:2 * r])
        g_g = jnp.tanh(g[:, 2 * r:3 * r])
        o_g = jax.nn.sigmoid(g[:, 3 * r:4 * r])
        c = f_g * c + i_g * g_g
        h = o_g * jnp.tanh(c)
        # h_att = (h_dynamic + static_embedding) * 2, time-major, into scratch.
        hatt_ref[t * n:(t + 1) * n, :] = att_scale * (h + se)
    hn_ref[0, :, :] = h
    cn_ref[0, :, :] = c

    # ---- output head: one batched matmul, then VPU multiply + lane reduce ----
    wl = mat_ref[L['wl']:L['wl'] + r, :r]
    h_att = hatt_ref[...]                                               # (T*N, r)
    y1 = jax.nn.leaky_relu(
        jnp.dot(h_att, wl, preferred_element_type=f32) + bl)            # (T*N, r)
    yw = y1 * wl2                                                       # (T*N, r)
    cols = [jnp.sum(yw[t * n:(t + 1) * n, :], axis=-1, keepdims=True)
            for t in range(t_steps)]                                    # T x (N, 1)
    y_ref[...] = jnp.concatenate(cols, axis=1) + bl2                    # (N, T) dense store


# ---------------------------------------------------------------------------
# One-time parameter folding / slab packing (review item 1 & 2)
# ---------------------------------------------------------------------------
def _block_diag(blocks):
    rows = sum(b.shape[0] for b in blocks)
    cols = sum(b.shape[1] for b in blocks)
    out = jnp.zeros((rows, cols), jnp.float32)
    i = j = 0
    for b in blocks:
        out = out.at[i:i + b.shape[0], j:j + b.shape[1]].set(b)
        i += b.shape[0]
        j += b.shape[1]
    return out


def _pack_param_slabs(params):
    d = sum(DYN_SPLITS)
    r = int(params['Whh'].shape[0])
    s = int(params['Ws'].shape[0])
    g4 = 4 * r
    width = _round_up(max(g4, d), 128)
    L = _slab_layout(d, r, s)

    gw1 = _block_diag([params['cov_w1'], params['clm_w1'],
                       params['hos_w1'], params['vac_w1']])            # (d, 4r)
    gb1 = jnp.concatenate([params['cov_b1'], params['clm_b1'],
                           params['hos_b1'], params['vac_b1']], axis=1)
    gw2 = _block_diag([params['cov_w2'], params['clm_w2'],
                       params['hos_w2'], params['vac_w2']])            # (4r, d)
    gb2 = jnp.concatenate([params['cov_b2'], params['clm_b2'],
                           params['hos_b2'], params['vac_b2']], axis=1)
    n_pos = DYN_SPLITS[0] + DYN_SPLITS[1] + DYN_SPLITS[2]
    sign = jnp.concatenate([jnp.ones((n_pos,), jnp.float32),
                            -jnp.ones((DYN_SPLITS[3],), jnp.float32)])

    mat = jnp.zeros((L['rows'], width), jnp.float32)
    mat = mat.at[L['gw1']:L['gw1'] + d, :g4].set(gw1)
    mat = mat.at[L['wih']:L['wih'] + d, :g4].set(params['Wih'])
    mat = mat.at[L['whh']:L['whh'] + r, :g4].set(params['Whh'])
    mat = mat.at[L['gw2']:L['gw2'] + g4, :d].set(gw2)
    mat = mat.at[L['ws']:L['ws'] + s, :r].set(params['Ws'])
    mat = mat.at[L['wl']:L['wl'] + r, :r].set(params['Wl'])

    vec = jnp.zeros((8, width), jnp.float32)
    vec = vec.at[ROW_GB1, :g4].set(gb1[0])
    vec = vec.at[ROW_BLSTM, :g4].set((params['bih'] + params['bhh'])[0])
    vec = vec.at[ROW_GB2, :d].set(gb2[0])
    vec = vec.at[ROW_SIGN, :d].set(sign)
    vec = vec.at[ROW_BS, :r].set(params['bs'][0])
    vec = vec.at[ROW_BL, :r].set(params['bl'][0])
    vec = vec.at[ROW_WL2, :r].set(params['Wl2'][:, 0])
    vec = vec.at[ROW_BL2, 0].set(params['bl2'][0, 0])
    return mat, vec


def make_hoist_forward(params):
    """One-time parameter folding; returns a jitted forward(dynamic, pop, demo, eco, geo)."""
    d = sum(DYN_SPLITS)
    r = int(params['Whh'].shape[0])
    mat_slab, vec_slab = _pack_param_slabs(params)      # built once, closed over
    vmem = pl.BlockSpec(memory_space=pltpu.MemorySpace.VMEM)

    @jax.jit
    def forward(dynamic, pop, demo, eco, geo=None):
        # `geo` only feeds the dist attention block, which is exactly a x2 scaling
        # of (h + static_embedding) in the reference; it never reaches the kernel.
        del geo
        n, t, _ = dynamic.shape
        x_tm = jnp.transpose(dynamic, (1, 0, 2)).reshape(t * n, d)     # time-major rows
        # TODO(synk): reference calls static_fc on the raw python tuple `static`
        # (would raise in torch); implemented as static_fc(concat([pop, demo, eco])).
        stat = jnp.concatenate([pop, demo, eco], axis=-1)

        y_nt, h_n, c_n = pl.pallas_call(
            _hoist_fused_kernel,
            out_shape=(
                jax.ShapeDtypeStruct((n, t), jnp.float32),
                jax.ShapeDtypeStruct((1, n, r), jnp.float32),
                jax.ShapeDtypeStruct((1, n, r), jnp.float32),
            ),
            in_specs=[vmem, vmem, vmem, vmem],
            out_specs=(vmem, vmem, vmem),
            scratch_shapes=[pltpu.VMEM((t * n, r), jnp.float32)],
        )(x_tm, stat, mat_slab, vec_slab)

        y = y_nt[..., None]                                            # (N, T, 1)
        return y, [None, None, (h_n, c_n)]

    return forward


# ---------------------------------------------------------------------------
# Deterministic parameter init (our own parameterization of the module)
# ---------------------------------------------------------------------------
def init_params(key, rnn_dim, static_dim):
    pdim, mdim, edim = static_dim
    keys = iter(jax.random.split(key, 48))

    def nrm(shape, scale=0.15):
        return (scale * jax.random.normal(next(keys), shape)).astype(jnp.float32)

    d = sum(DYN_SPLITS)
    p = {}
    for name, fdim in zip(('cov', 'clm', 'hos', 'vac'), DYN_SPLITS):
        p[f'{name}_w1'] = nrm((fdim, rnn_dim))
        p[f'{name}_b1'] = nrm((1, rnn_dim))
        p[f'{name}_w2'] = nrm((rnn_dim, fdim))
        p[f'{name}_b2'] = nrm((1, fdim))
    p['Wih'] = nrm((d, 4 * rnn_dim))
    p['Whh'] = nrm((rnn_dim, 4 * rnn_dim))
    p['bih'] = nrm((1, 4 * rnn_dim))
    p['bhh'] = nrm((1, 4 * rnn_dim))
    sdim = pdim + mdim + edim
    p['Ws'] = nrm((sdim, rnn_dim));    p['bs'] = nrm((1, rnn_dim))
    p['Wl'] = nrm((rnn_dim, rnn_dim)); p['bl'] = nrm((1, rnn_dim))
    p['Wl2'] = nrm((rnn_dim, 1));      p['bl2'] = nrm((1, 1))
    # Pairwise-attention parameters: kept for module fidelity / the reference
    # check, but provably irrelevant to the output (see kernel comment).
    p['W_pop'] = nrm((pdim, pdim));   p['a_pop'] = nrm((2 * pdim, 1))
    p['W_demo'] = nrm((mdim, mdim));  p['a_demo'] = nrm((2 * mdim, 1))
    p['W_eco'] = nrm((edim, edim));   p['a_eco'] = nrm((2 * edim, 1))
    p['W_geo'] = nrm((2, 2));         p['a_geo'] = nrm((2, 1))
    return p


# ---------------------------------------------------------------------------
# Literal (unfused) JAX transcription of the PyTorch forward, for verification
# ---------------------------------------------------------------------------
def _reference_forward(params, dynamic, pop, demo, eco, geo):
    n, t, d = dynamic.shape
    r = params['Whh'].shape[0]

    def pair_logits(x, w, a):
        hx = x @ w
        dim = x.shape[1]
        return jax.nn.sigmoid(hx @ a[:dim] + (hx @ a[dim:]).T)          # (N, N)

    dist = pair_logits(pop, params['W_pop'], params['a_pop'])
    dist = dist + pair_logits(demo, params['W_demo'], params['a_demo'])
    dist = dist + pair_logits(eco, params['W_eco'], params['a_eco'])
    dist = dist + jax.nn.sigmoid(
        (geo @ params['W_geo'] @ params['a_geo']).reshape(n, n))
    dist = jax.nn.softmax(dist, axis=-1)

    xs = dynamic.reshape(n * t, d)

    def mlp(xg, pre):
        return jax.nn.sigmoid(
            jax.nn.leaky_relu(xg @ params[pre + '_w1'] + params[pre + '_b1'])
            @ params[pre + '_w2'] + params[pre + '_b2'])

    s0, s1, s2, _ = DYN_SPLITS
    tw = jnp.concatenate(
        [mlp(xs[:, :s0], 'cov'),
         mlp(xs[:, s0:s0 + s1], 'clm'),
         mlp(xs[:, s0 + s1:s0 + s1 + s2], 'hos'),
         -mlp(xs[:, s0 + s1 + s2:], 'vac')], axis=-1).reshape(n, t, d)
    lstm_in = tw * dynamic

    bias = params['bih'] + params['bhh']
    h = jnp.zeros((n, r), jnp.float32)
    c = jnp.zeros((n, r), jnp.float32)
    hs = []
    for step in range(t):
        g = lstm_in[:, step, :] @ params['Wih'] + h @ params['Whh'] + bias
        i_g = jax.nn.sigmoid(g[:, :r]);        f_g = jax.nn.sigmoid(g[:, r:2 * r])
        g_g = jnp.tanh(g[:, 2 * r:3 * r]);     o_g = jax.nn.sigmoid(g[:, 3 * r:])
        c = f_g * c + i_g * g_g
        h = o_g * jnp.tanh(c)
        hs.append(h)
    h_dyn = jnp.stack(hs, axis=1)                                       # (N, T, r)

    stat = jnp.concatenate([pop, demo, eco], axis=-1)
    se = jax.nn.leaky_relu(stat @ params['Ws'] + params['bs'])
    hh = h_dyn + se[:, None, :]
    h_rep = jnp.broadcast_to(hh[:, None, :, :], (n, n, t, r))
    h_att = hh + jnp.sum(h_rep * dist[:, :, None, None], axis=1)
    y = jax.nn.leaky_relu(h_att @ params['Wl'] + params['bl']) @ params['Wl2'] \
        + params['bl2']
    return y, h, c


if __name__ == "__main__":
    key = jax.random.PRNGKey(0)
    pkey, dkey = jax.random.split(key)
    N, T, rnn_dim = 8, 8, 32
    static_dim = (4, 6, 3)
    D = sum(DYN_SPLITS)                      # 42 = 1 + 20 + 4 + 17 (fixed by the module)

    params = init_params(pkey, rnn_dim, static_dim)
    hoist_forward = make_hoist_forward(params)      # one-time folding / slab packing

    k1, k2, k3, k4, k5 = jax.random.split(dkey, 5)
    dynamic = jax.random.normal(k1, (N, T, D), dtype=jnp.float32)
    pop = jax.random.normal(k2, (N, static_dim[0]), dtype=jnp.float32)
    demo = jax.random.normal(k3, (N, static_dim[1]), dtype=jnp.float32)
    eco = jax.random.normal(k4, (N, static_dim[2]), dtype=jnp.float32)
    geo = jax.random.normal(k5, (N * N, 2), dtype=jnp.float32)

    y, aux = hoist_forward(dynamic, pop, demo, eco, geo)
    (y,) = jax.block_until_ready((y,))
    h_n, c_n = aux[2]

    assert y.shape == (N, T, 1)
    assert h_n.shape == (1, N, rnn_dim) and c_n.shape == (1, N, rnn_dim)
    assert bool(jnp.all(jnp.isfinite(y)))

    # Sanity check against a literal transcription of the PyTorch forward (loose
    # tolerance: default MXU matmul precision / different op associativity).
    y_ref, h_ref, c_ref = _reference_forward(params, dynamic, pop, demo, eco, geo)
    assert bool(jnp.allclose(y, y_ref, atol=2e-2, rtol=2e-2))
    assert bool(jnp.allclose(h_n[0], h_ref, atol=2e-2, rtol=2e-2))
    assert bool(jnp.allclose(c_n[0], c_ref, atol=2e-2, rtol=2e-2))

    print("KERNEL_OK")
</pallas_src>

<mosaic_0001>
module attributes {stable_mosaic.version = 11 : i64} {
  func.func @_hoist_fused_kernel(%arg0: memref<64x42xf32, #tpu.memory_space<vmem>>, %arg1: memref<8x13xf32, #tpu.memory_space<vmem>>, %arg2: memref<304x128xf32, #tpu.memory_space<vmem>>, %arg3: memref<8x128xf32, #tpu.memory_space<vmem>>, %arg4: memref<8x8xf32, #tpu.memory_space<vmem>>, %arg5: memref<1x8x32xf32, #tpu.memory_space<vmem>>, %arg6: memref<1x8x32xf32, #tpu.memory_space<vmem>>, %arg7: memref<64x32xf32, #tpu.memory_space<vmem>>) attributes {dimension_semantics = [], scalar_prefetch = 0 : i64, scratch_operands = 1 : i64, tpu.core_type = #tpu.core_type<tc>} {
    %c0 = arith.constant 0 : index
    %c0_0 = arith.constant 0 : index
    %0 = vector.load %arg3[%c0, %c0_0] : memref<8x128xf32, #tpu.memory_space<vmem>>, vector<1x128xf32>
    %c1 = arith.constant 1 : index
    %c0_1 = arith.constant 0 : index
    %1 = vector.load %arg3[%c1, %c0_1] : memref<8x128xf32, #tpu.memory_space<vmem>>, vector<1x128xf32>
    %c2 = arith.constant 2 : index
    %c0_2 = arith.constant 0 : index
    %2 = vector.load %arg3[%c2, %c0_2] : memref<8x128xf32, #tpu.memory_space<vmem>>, vector<1x42xf32>
    %c3 = arith.constant 3 : index
    %c0_3 = arith.constant 0 : index
    %3 = vector.load %arg3[%c3, %c0_3] : memref<8x128xf32, #tpu.memory_space<vmem>>, vector<1x42xf32>
    %c4 = arith.constant 4 : index
    %c0_4 = arith.constant 0 : index
    %4 = vector.load %arg3[%c4, %c0_4] : memref<8x128xf32, #tpu.memory_space<vmem>>, vector<1x32xf32>
    %c5 = arith.constant 5 : index
    %c0_5 = arith.constant 0 : index
    %5 = vector.load %arg3[%c5, %c0_5] : memref<8x128xf32, #tpu.memory_space<vmem>>, vector<1x32xf32>
    %c6 = arith.constant 6 : index
    %c0_6 = arith.constant 0 : index
    %6 = vector.load %arg3[%c6, %c0_6] : memref<8x128xf32, #tpu.memory_space<vmem>>, vector<1x32xf32>
    %c7 = arith.constant 7 : index
    %c0_7 = arith.constant 0 : index
    %7 = vector.load %arg3[%c7, %c0_7] : memref<8x128xf32, #tpu.memory_space<vmem>>, vector<1x1xf32>
    %c256 = arith.constant 256 : index
    %c0_8 = arith.constant 0 : index
    %8 = vector.load %arg2[%c256, %c0_8] : memref<304x128xf32, #tpu.memory_space<vmem>>, vector<13x32xf32>
    %c0_9 = arith.constant 0 : index
    %c0_10 = arith.constant 0 : index
    %9 = vector.load %arg1[%c0_9, %c0_10] : memref<8x13xf32, #tpu.memory_space<vmem>>, vector<8x13xf32>
    %cst = arith.constant dense<0.000000e+00> : vector<8x32xf32>
    %10 = tpu.matmul %9, %8, %cst {dimension_numbers = #tpu.dot_dimension_numbers<[1], [0], [0], [1], [0, 0, 1, 1], [], []>} : vector<8x13xf32>, vector<13x32xf32>, vector<8x32xf32> -> vector<8x32xf32>
    %11 = vector.broadcast %4 : vector<1x32xf32> to vector<8x32xf32>
    %12 = arith.addf %10, %11 : vector<8x32xf32>
    %cst_11 = arith.constant 0.000000e+00 : f32
    %13 = vector.broadcast %cst_11 : f32 to vector<8x32xf32>
    %14 = arith.cmpf oge, %12, %13 : vector<8x32xf32>
    %cst_12 = arith.constant 0.00999999977 : f32
    %15 = vector.broadcast %cst_12 : f32 to vector<8x32xf32>
    %16 = arith.mulf %15, %12 : vector<8x32xf32>
    %17 = arith.select %14, %12, %16 : vector<8x32xi1>, vector<8x32xf32>
    %c0_13 = arith.constant 0 : index
    %c0_14 = arith.constant 0 : index
    %18 = vector.load %arg0[%c0_13, %c0_14] : memref<64x42xf32, #tpu.memory_space<vmem>>, vector<64x42xf32>
    %c0_15 = arith.constant 0 : index
    %c0_16 = arith.constant 0 : index
    %19 = vector.load %arg2[%c0_15, %c0_16] : memref<304x128xf32, #tpu.memory_space<vmem>>, vector<42x128xf32>
    %c128 = arith.constant 128 : index
    %c0_17 = arith.constant 0 : index
    %20 = vector.load %arg2[%c128, %c0_17] : memref<304x128xf32, #tpu.memory_space<vmem>>, vector<128x42xf32>
    %cst_18 = arith.constant dense<0.000000e+00> : vector<64x128xf32>
    %21 = tpu.matmul %18, %19, %cst_18 {dimension_numbers = #tpu.dot_dimension_numbers<[1], [0], [0], [1], [0, 0, 1, 1], [], []>} : vector<64x42xf32>, vector<42x128xf32>, vector<64x128xf32> -> vector<64x128xf32>
    %22 = vector.broadcast %0 : vector<1x128xf32> to vector<64x128xf32>
    %23 = arith.addf %21, %22 : vector<64x128xf32>
    %cst_19 = arith.constant 0.000000e+00 : f32
    %24 = vector.broadcast %cst_19 : f32 to vector<64x128xf32>
    %25 = arith.cmpf oge, %23, %24 : vector<64x128xf32>
    %cst_20 = arith.constant 0.00999999977 : f32
    %26 = vector.broadcast %cst_20 : f32 to vector<64x128xf32>
    %27 = arith.mulf %26, %23 : vector<64x128xf32>
    %28 = arith.select %25, %23, %27 : vector<64x128xi1>, vector<64x128xf32>
    %cst_21 = arith.constant dense<0.000000e+00> : vector<64x42xf32>
    %29 = tpu.matmul %28, %20, %cst_21 {dimension_numbers = #tpu.dot_dimension_numbers<[1], [0], [0], [1], [0, 0, 1, 1], [], []>} : vector<64x128xf32>, vector<128x42xf32>, vector<64x42xf32> -> vector<64x42xf32>
    %30 = vector.broadcast %2 : vector<1x42xf32> to vector<64x42xf32>
    %31 = arith.addf %29, %30 : vector<64x42xf32>
    %32 = arith.negf %31 : vector<64x42xf32>
    %33 = math.exp %32 : vector<64x42xf32>
    %cst_22 = arith.constant 1.000000e+00 : f32
    %34 = vector.broadcast %cst_22 : f32 to vector<64x42xf32>
    %35 = arith.addf %34, %33 : vector<64x42xf32>
    %36 = arith.divf %34, %35 : vector<64x42xf32>
    %37 = vector.broadcast %3 : vector<1x42xf32> to vector<64x42xf32>
    %38 = arith.mulf %37, %36 : vector<64x42xf32>
    %39 = arith.mulf %38, %18 : vector<64x42xf32>
    %c48 = arith.constant 48 : index
    %c0_23 = arith.constant 0 : index
    %40 = vector.load %arg2[%c48, %c0_23] : memref<304x128xf32, #tpu.memory_space<vmem>>, vector<42x128xf32>
    %cst_24 = arith.constant dense<0.000000e+00> : vector<64x128xf32>
    %41 = tpu.matmul %39, %40, %cst_24 {dimension_numbers = #tpu.dot_dimension_numbers<[1], [0], [0], [1], [0, 0, 1, 1], [], []>} : vector<64x42xf32>, vector<42x128xf32>, vector<64x128xf32> -> vector<64x128xf32>
    %42 = vector.broadcast %1 : vector<1x128xf32> to vector<64x128xf32>
    %43 = arith.addf %41, %42 : vector<64x128xf32>
    %c96 = arith.constant 96 : index
    %c0_25 = arith.constant 0 : index
    %44 = vector.load %arg2[%c96, %c0_25] : memref<304x128xf32, #tpu.memory_space<vmem>>, vector<32x128xf32>
    %cst_26 = arith.constant 0.000000e+00 : f32
    %45 = vector.broadcast %cst_26 : f32 to vector<8x32xf32>
    %cst_27 = arith.constant 0.000000e+00 : f32
    %46 = vector.broadcast %cst_27 : f32 to vector<8x32xf32>
    %47 = vector.extract_strided_slice %43 {offsets = [0, 0], sizes = [8, 128], strides = [1, 1]} : vector<64x128xf32> to vector<8x128xf32>
    %cst_28 = arith.constant dense<0.000000e+00> : vector<8x128xf32>
    %48 = tpu.matmul %45, %44, %cst_28 {dimension_numbers = #tpu.dot_dimension_numbers<[1], [0], [0], [1], [0, 0, 1, 1], [], []>} : vector<8x32xf32>, vector<32x128xf32>, vector<8x128xf32> -> vector<8x128xf32>
    %49 = arith.addf %47, %48 : vector<8x128xf32>
    %50 = vector.extract_strided_slice %49 {offsets = [0, 0], sizes = [8, 32], strides = [1, 1]} : vector<8x128xf32> to vector<8x32xf32>
    %51 = arith.negf %50 : vector<8x32xf32>
    %52 = math.exp %51 : vector<8x32xf32>
    %cst_29 = arith.constant 1.000000e+00 : f32
    %53 = vector.broadcast %cst_29 : f32 to vector<8x32xf32>
    %54 = arith.addf %53, %52 : vector<8x32xf32>
    %55 = arith.divf %53, %54 : vector<8x32xf32>
    %56 = vector.extract_strided_slice %49 {offsets = [0, 32], sizes = [8, 32], strides = [1, 1]} : vector<8x128xf32> to vector<8x32xf32>
    %57 = arith.negf %56 : vector<8x32xf32>
    %58 = math.exp %57 : vector<8x32xf32>
    %cst_30 = arith.constant 1.000000e+00 : f32
    %59 = vector.broadcast %cst_30 : f32 to vector<8x32xf32>
    %60 = arith.addf %59, %58 : vector<8x32xf32>
    %61 = arith.divf %59, %60 : vector<8x32xf32>
    %62 = vector.extract_strided_slice %49 {offsets = [0, 64], sizes = [8, 32], strides = [1, 1]} : vector<8x128xf32> to vector<8x32xf32>
    %63 = math.tanh %62 : vector<8x32xf32>
    %64 = vector.extract_strided_slice %49 {offsets = [0, 96], sizes = [8, 32], strides = [1, 1]} : vector<8x128xf32> to vector<8x32xf32>
    %65 = arith.negf %64 : vector<8x32xf32>
    %66 = math.exp %65 : vector<8x32xf32>
    %cst_31 = arith.constant 1.000000e+00 : f32
    %67 = vector.broadcast %cst_31 : f32 to vector<8x32xf32>
    %68 = arith.addf %67, %66 : vector<8x32xf32>
    %69 = arith.divf %67, %68 : vector<8x32xf32>
    %70 = arith.mulf %61, %46 : vector<8x32xf32>
    %71 = arith.mulf %55, %63 : vector<8x32xf32>
    %72 = arith.addf %70, %71 : vector<8x32xf32>
    %73 = math.tanh %72 : vector<8x32xf32>
    %74 = arith.mulf %69, %73 : vector<8x32xf32>
    %75 = arith.addf %74, %17 : vector<8x32xf32>
    %cst_32 = arith.constant 2.000000e+00 : f32
    %76 = vector.broadcast %cst_32 : f32 to vector<8x32xf32>
    %77 = arith.mulf %76, %75 : vector<8x32xf32>
    %c0_33 = arith.constant 0 : index
    %c0_34 = arith.constant 0 : index
    %78 = vector.load %arg7[%c0_33, %c0_34] : memref<64x32xf32, #tpu.memory_space<vmem>>, vector<8x32xf32>
    tpu.vector_store %arg7[%c0_33, %c0_34], %77 {strides = array<i32>} : memref<64x32xf32, #tpu.memory_space<vmem>>, vector<8x32xf32>,
    %79 = vector.extract_strided_slice %43 {offsets = [8, 0], sizes = [8, 128], strides = [1, 1]} : vector<64x128xf32> to vector<8x128xf32>
    %cst_35 = arith.constant dense<0.000000e+00> : vector<8x128xf32>
    %80 = tpu.matmul %74, %44, %cst_35 {dimension_numbers = #tpu.dot_dimension_numbers<[1], [0], [0], [1], [0, 0, 1, 1], [], []>} : vector<8x32xf32>, vector<32x128xf32>, vector<8x128xf32> -> vector<8x128xf32>
    %81 = arith.addf %79, %80 : vector<8x128xf32>
    %82 = vector.extract_strided_slice %81 {offsets = [0, 0], sizes = [8, 32], strides = [1, 1]} : vector<8x128xf32> to vector<8x32xf32>
    %83 = arith.negf %82 : vector<8x32xf32>
    %84 = math.exp %83 : vector<8x32xf32>
    %cst_36 = arith.constant 1.000000e+00 : f32
    %85 = vector.broadcast %cst_36 : f32 to vector<8x32xf32>
    %86 = arith.addf %85, %84 : vector<8x32xf32>
    %87 = arith.divf %85, %86 : vector<8x32xf32>
    %88 = vector.extract_strided_slice %81 {offsets = [0, 32], sizes = [8, 32], strides = [1, 1]} : vector<8x128xf32> to vector<8x32xf32>
    %89 = arith.negf %88 : vector<8x32xf32>
    %90 = math.exp %89 : vector<8x32xf32>
    %cst_37 = arith.constant 1.000000e+00 : f32
    %91 = vector.broadcast %cst_37 : f32 to vector<8x32xf32>
    %92 = arith.addf %91, %90 : vector<8x32xf32>
    %93 = arith.divf %91, %92 : vector<8x32xf32>
    %94 = vector.extract_strided_slice %81 {offsets = [0, 64], sizes = [8, 32], strides = [1, 1]} : vector<8x128xf32> to vector<8x32xf32>
    %95 = math.tanh %94 : vector<8x32xf32>
    %96 = vector.extract_strided_slice %81 {offsets = [0, 96], sizes = [8, 32], strides = [1, 1]} : vector<8x128xf32> to vector<8x32xf32>
    %97 = arith.negf %96 : vector<8x32xf32>
    %98 = math.exp %97 : vector<8x32xf32>
    %cst_38 = arith.constant 1.000000e+00 : f32
    %99 = vector.broadcast %cst_38 : f32 to vector<8x32xf32>
    %100 = arith.addf %99, %98 : vector<8x32xf32>
    %101 = arith.divf %99, %100 : vector<8x32xf32>
    %102 = arith.mulf %93, %72 : vector<8x32xf32>
    %103 = arith.mulf %87, %95 : vector<8x32xf32>
    %104 = arith.addf %102, %103 : vector<8x32xf32>
    %105 = math.tanh %104 : vector<8x32xf32>
    %106 = arith.mulf %101, %105 : vector<8x32xf32>
    %107 = arith.addf %106, %17 : vector<8x32xf32>
    %cst_39 = arith.constant 2.000000e+00 : f32
    %108 = vector.broadcast %cst_39 : f32 to vector<8x32xf32>
    %109 = arith.mulf %108, %107 : vector<8x32xf32>
    %c8 = arith.constant 8 : index
    %c0_40 = arith.constant 0 : index
    %110 = vector.load %arg7[%c8, %c0_40] : memref<64x32xf32, #tpu.memory_space<vmem>>, vector<8x32xf32>
    tpu.vector_store %arg7[%c8, %c0_40], %109 {strides = array<i32>} : memref<64x32xf32, #tpu.memory_space<vmem>>, vector<8x32xf32>,
    %111 = vector.extract_strided_slice %43 {offsets = [16, 0], sizes = [8, 128], strides = [1, 1]} : vector<64x128xf32> to vector<8x128xf32>
    %cst_41 = arith.constant dense<0.000000e+00> : vector<8x128xf32>
    %112 = tpu.matmul %106, %44, %cst_41 {dimension_numbers = #tpu.dot_dimension_numbers<[1], [0], [0], [1], [0, 0, 1, 1], [], []>} : vector<8x32xf32>, vector<32x128xf32>, vector<8x128xf32> -> vector<8x128xf32>
    %113 = arith.addf %111, %112 : vector<8x128xf32>
    %114 = vector.extract_strided_slice %113 {offsets = [0, 0], sizes = [8, 32], strides = [1, 1]} : vector<8x128xf32> to vector<8x32xf32>
    %115 = arith.negf %114 : vector<8x32xf32>
    %116 = math.exp %115 : vector<8x32xf32>
    %cst_42 = arith.constant 1.000000e+00 : f32
    %117 = vector.broadcast %cst_42 : f32 to vector<8x32xf32>
    %118 = arith.addf %117, %116 : vector<8x32xf32>
    %119 = arith.divf %117, %118 : vector<8x32xf32>
    %120 = vector.extract_strided_slice %113 {offsets = [0, 32], sizes = [8, 32], strides = [1, 1]} : vector<8x128xf32> to vector<8x32xf32>
    %121 = arith.negf %120 : vector<8x32xf32>
    %122 = math.exp %121 : vector<8x32xf32>
    %cst_43 = arith.constant 1.000000e+00 : f32
    %123 = vector.broadcast %cst_43 : f32 to vector<8x32xf32>
    %124 = arith.addf %123, %122 : vector<8x32xf32>
    %125 = arith.divf %123, %124 : vector<8x32xf32>
    %126 = vector.extract_strided_slice %113 {offsets = [0, 64], sizes = [8, 32], strides = [1, 1]} : vector<8x128xf32> to vector<8x32xf32>
    %127 = math.tanh %126 : vector<8x32xf32>
    %128 = vector.extract_strided_slice %113 {offsets = [0, 96], sizes = [8, 32], strides = [1, 1]} : vector<8x128xf32> to vector<8x32xf32>
    %129 = arith.negf %128 : vector<8x32xf32>
    %130 = math.exp %129 : vector<8x32xf32>
    %cst_44 = arith.constant 1.000000e+00 : f32
    %131 = vector.broadcast %cst_44 : f32 to vector<8x32xf32>
    %132 = arith.addf %131, %130 : vector<8x32xf32>
    %133 = arith.divf %131, %132 : vector<8x32xf32>
    %134 = arith.mulf %125, %104 : vector<8x32xf32>
    %135 = arith.mulf %119, %127 : vector<8x32xf32>
    %136 = arith.addf %134, %135 : vector<8x32xf32>
    %137 = math.tanh %136 : vector<8x32xf32>
    %138 = arith.mulf %133, %137 : vector<8x32xf32>
    %139 = arith.addf %138, %17 : vector<8x32xf32>
    %cst_45 = arith.constant 2.000000e+00 : f32
    %140 = vector.broadcast %cst_45 : f32 to vector<8x32xf32>
    %141 = arith.mulf %140, %139 : vector<8x32xf32>
    %c16 = arith.constant 16 : index
    %c0_46 = arith.constant 0 : index
    %142 = vector.load %arg7[%c16, %c0_46] : memref<64x32xf32, #tpu.memory_space<vmem>>, vector<8x32xf32>
    tpu.vector_store %arg7[%c16, %c0_46], %141 {strides = array<i32>} : memref<64x32xf32, #tpu.memory_space<vmem>>, vector<8x32xf32>,
    %143 = vector.extract_strided_slice %43 {offsets = [24, 0], sizes = [8, 128], strides = [1, 1]} : vector<64x128xf32> to vector<8x128xf32>
    %cst_47 = arith.constant dense<0.000000e+00> : vector<8x128xf32>
    %144 = tpu.matmul %138, %44, %cst_47 {dimension_numbers = #tpu.dot_dimension_numbers<[1], [0], [0], [1], [0, 0, 1, 1], [], []>} : vector<8x32xf32>, vector<32x128xf32>, vector<8x128xf32> -> vector<8x128xf32>
    %145 = arith.addf %143, %144 : vector<8x128xf32>
    %146 = vector.extract_strided_slice %145 {offsets = [0, 0], sizes = [8, 32], strides = [1, 1]} : vector<8x128xf32> to vector<8x32xf32>
    %147 = arith.negf %146 : vector<8x32xf32>
    %148 = math.exp %147 : vector<8x32xf32>
    %cst_48 = arith.constant 1.000000e+00 : f32
    %149 = vector.broadcast %cst_48 : f32 to vector<8x32xf32>
    %150 = arith.addf %149, %148 : vector<8x32xf32>
    %151 = arith.divf %149, %150 : vector<8x32xf32>
    %152 = vector.extract_strided_slice %145 {offsets = [0, 32], sizes = [8, 32], strides = [1, 1]} : vector<8x128xf32> to vector<8x32xf32>
    %153 = arith.negf %152 : vector<8x32xf32>
    %154 = math.exp %153 : vector<8x32xf32>
    %cst_49 = arith.constant 1.000000e+00 : f32
    %155 = vector.broadcast %cst_49 : f32 to vector<8x32xf32>
    %156 = arith.addf %155, %154 : vector<8x32xf32>
    %157 = arith.divf %155, %156 : vector<8x32xf32>
    %158 = vector.extract_strided_slice %145 {offsets = [0, 64], sizes = [8, 32], strides = [1, 1]} : vector<8x128xf32> to vector<8x32xf32>
    %159 = math.tanh %158 : vector<8x32xf32>
    %160 = vector.extract_strided_slice %145 {offsets = [0, 96], sizes = [8, 32], strides = [1, 1]} : vector<8x128xf32> to vector<8x32xf32>
    %161 = arith.negf %160 : vector<8x32xf32>
    %162 = math.exp %161 : vector<8x32xf32>
    %cst_50 = arith.constant 1.000000e+00 : f32
    %163 = vector.broadcast %cst_50 : f32 to vector<8x32xf32>
    %164 = arith.addf %163, %162 : vector<8x32xf32>
    %165 = arith.divf %163, %164 : vector<8x32xf32>
    %166 = arith.mulf %157, %136 : vector<8x32xf32>
    %167 = arith.mulf %151, %159 : vector<8x32xf32>
    %168 = arith.addf %166, %167 : vector<8x32xf32>
    %169 = math.tanh %168 : vector<8x32xf32>
    %170 = arith.mulf %165, %169 : vector<8x32xf32>
    %171 = arith.addf %170, %17 : vector<8x32xf32>
    %cst_51 = arith.constant 2.000000e+00 : f32
    %172 = vector.broadcast %cst_51 : f32 to vector<8x32xf32>
    %173 = arith.mulf %172, %171 : vector<8x32xf32>
    %c24 = arith.constant 24 : index
    %c0_52 = arith.constant 0 : index
    %174 = vector.load %arg7[%c24, %c0_52] : memref<64x32xf32, #tpu.memory_space<vmem>>, vector<8x32xf32>
    tpu.vector_store %arg7[%c24, %c0_52], %173 {strides = array<i32>} : memref<64x32xf32, #tpu.memory_space<vmem>>, vector<8x32xf32>,
    %175 = vector.extract_strided_slice %43 {offsets = [32, 0], sizes = [8, 128], strides = [1, 1]} : vector<64x128xf32> to vector<8x128xf32>
    %cst_53 = arith.constant dense<0.000000e+00> : vector<8x128xf32>
    %176 = tpu.matmul %170, %44, %cst_53 {dimension_numbers = #tpu.dot_dimension_numbers<[1], [0], [0], [1], [0, 0, 1, 1], [], []>} : vector<8x32xf32>, vector<32x128xf32>, vector<8x128xf32> -> vector<8x128xf32>
    %177 = arith.addf %175, %176 : vector<8x128xf32>
    %178 = vector.extract_strided_slice %177 {offsets = [0, 0], sizes = [8, 32], strides = [1, 1]} : vector<8x128xf32> to vector<8x32xf32>
    %179 = arith.negf %178 : vector<8x32xf32>
    %180 = math.exp %179 : vector<8x32xf32>
    %cst_54 = arith.constant 1.000000e+00 : f32
    %181 = vector.broadcast %cst_54 : f32 to vector<8x32xf32>
    %182 = arith.addf %181, %180 : vector<8x32xf32>
    %183 = arith.divf %181, %182 : vector<8x32xf32>
    %184 = vector.extract_strided_slice %177 {offsets = [0, 32], sizes = [8, 32], strides = [1, 1]} : vector<8x128xf32> to vector<8x32xf32>
    %185 = arith.negf %184 : vector<8x32xf32>
    %186 = math.exp %185 : vector<8x32xf32>
    %cst_55 = arith.constant 1.000000e+00 : f32
    %187 = vector.broadcast %cst_55 : f32 to vector<8x32xf32>
    %188 = arith.addf %187, %186 : vector<8x32xf32>
    %189 = arith.divf %187, %188 : vector<8x32xf32>
    %190 = vector.extract_strided_slice %177 {offsets = [0, 64], sizes = [8, 32], strides = [1, 1]} : vector<8x128xf32> to vector<8x32xf32>
    %191 = math.tanh %190 : vector<8x32xf32>
    %192 = vector.extract_strided_slice %177 {offsets = [0, 96], sizes = [8, 32], strides = [1, 1]} : vector<8x128xf32> to vector<8x32xf32>
    %193 = arith.negf %192 : vector<8x32xf32>
    %194 = math.exp %193 : vector<8x32xf32>
    %cst_56 = arith.constant 1.000000e+00 : f32
    %195 = vector.broadcast %cst_56 : f32 to vector<8x32xf32>
    %196 = arith.addf %195, %194 : vector<8x32xf32>
    %197 = arith.divf %195, %196 : vector<8x32xf32>
    %198 = arith.mulf %189, %168 : vector<8x32xf32>
    %199 = arith.mulf %183, %191 : vector<8x32xf32>
    %200 = arith.addf %198, %199 : vector<8x32xf32>
    %201 = math.tanh %200 : vector<8x32xf32>
    %202 = arith.mulf %197, %201 : vector<8x32xf32>
    %203 = arith.addf %202, %17 : vector<8x32xf32>
    %cst_57 = arith.constant 2.000000e+00 : f32
    %204 = vector.broadcast %cst_57 : f32 to vector<8x32xf32>
    %205 = arith.mulf %204, %203 : vector<8x32xf32>
    %c32 = arith.constant 32 : index
    %c0_58 = arith.constant 0 : index
    %206 = vector.load %arg7[%c32, %c0_58] : memref<64x32xf32, #tpu.memory_space<vmem>>, vector<8x32xf32>
    tpu.vector_store %arg7[%c32, %c0_58], %205 {strides = array<i32>} : memref<64x32xf32, #tpu.memory_space<vmem>>, vector<8x32xf32>,
    %207 = vector.extract_strided_slice %43 {offsets = [40, 0], sizes = [8, 128], strides = [1, 1]} : vector<64x128xf32> to vector<8x128xf32>
    %cst_59 = arith.constant dense<0.000000e+00> : vector<8x128xf32>
    %208 = tpu.matmul %202, %44, %cst_59 {dimension_numbers = #tpu.dot_dimension_numbers<[1], [0], [0], [1], [0, 0, 1, 1], [], []>} : vector<8x32xf32>, vector<32x128xf32>, vector<8x128xf32> -> vector<8x128xf32>
    %209 = arith.addf %207, %208 : vector<8x128xf32>
    %210 = vector.extract_strided_slice %209 {offsets = [0, 0], sizes = [8, 32], strides = [1, 1]} : vector<8x128xf32> to vector<8x32xf32>
    %211 = arith.negf %210 : vector<8x32xf32>
    %212 = math.exp %211 : vector<8x32xf32>
    %cst_60 = arith.constant 1.000000e+00 : f32
    %213 = vector.broadcast %cst_60 : f32 to vector<8x32xf32>
    %214 = arith.addf %213, %212 : vector<8x32xf32>
    %215 = arith.divf %213, %214 : vector<8x32xf32>
    %216 = vector.extract_strided_slice %209 {offsets = [0, 32], sizes = [8, 32], strides = [1, 1]} : vector<8x128xf32> to vector<8x32xf32>
    %217 = arith.negf %216 : vector<8x32xf32>
    %218 = math.exp %217 : vector<8x32xf32>
    %cst_61 = arith.constant 1.000000e+00 : f32
    %219 = vector.broadcast %cst_61 : f32 to vector<8x32xf32>
    %220 = arith.addf %219, %218 : vector<8x32xf32>
    %221 = arith.divf %219, %220 : vector<8x32xf32>
    %222 = vector.extract_strided_slice %209 {offsets = [0, 64], sizes = [8, 32], strides = [1, 1]} : vector<8x128xf32> to vector<8x32xf32>
    %223 = math.tanh %222 : vector<8x32xf32>
    %224 = vector.extract_strided_slice %209 {offsets = [0, 96], sizes = [8, 32], strides = [1, 1]} : vector<8x128xf32> to vector<8x32xf32>
    %225 = arith.negf %224 : vector<8x32xf32>
    %226 = math.exp %225 : vector<8x32xf32>
    %cst_62 = arith.constant 1.000000e+00 : f32
    %227 = vector.broadcast %cst_62 : f32 to vector<8x32xf32>
    %228 = arith.addf %227, %226 : vector<8x32xf32>
    %229 = arith.divf %227, %228 : vector<8x32xf32>
    %230 = arith.mulf %221, %200 : vector<8x32xf32>
    %231 = arith.mulf %215, %223 : vector<8x32xf32>
    %232 = arith.addf %230, %231 : vector<8x32xf32>
    %233 = math.tanh %232 : vector<8x32xf32>
    %234 = arith.mulf %229, %233 : vector<8x32xf32>
    %235 = arith.addf %234, %17 : vector<8x32xf32>
    %cst_63 = arith.constant 2.000000e+00 : f32
    %236 = vector.broadcast %cst_63 : f32 to vector<8x32xf32>
    %237 = arith.mulf %236, %235 : vector<8x32xf32>
    %c40 = arith.constant 40 : index
    %c0_64 = arith.constant 0 : index
    %238 = vector.load %arg7[%c40, %c0_64] : memref<64x32xf32, #tpu.memory_space<vmem>>, vector<8x32xf32>
    tpu.vector_store %arg7[%c40, %c0_64], %237 {strides = array<i32>} : memref<64x32xf32, #tpu.memory_space<vmem>>, vector<8x32xf32>,
    %239 = vector.extract_strided_slice %43 {offsets = [48, 0], sizes = [8, 128], strides = [1, 1]} : vector<64x128xf32> to vector<8x128xf32>
    %cst_65 = arith.constant dense<0.000000e+00> : vector<8x128xf32>
    %240 = tpu.matmul %234, %44, %cst_65 {dimension_numbers = #tpu.dot_dimension_numbers<[1], [0], [0], [1], [0, 0, 1, 1], [], []>} : vector<8x32xf32>, vector<32x128xf32>, vector<8x128xf32> -> vector<8x128xf32>
    %241 = arith.addf %239, %240 : vector<8x128xf32>
    %242 = vector.extract_strided_slice %241 {offsets = [0, 0], sizes = [8, 32], strides = [1, 1]} : vector<8x128xf32> to vector<8x32xf32>
    %243 = arith.negf %242 : vector<8x32xf32>
    %244 = math.exp %243 : vector<8x32xf32>
    %cst_66 = arith.constant 1.000000e+00 : f32
    %245 = vector.broadcast %cst_66 : f32 to vector<8x32xf32>
    %246 = arith.addf %245, %244 : vector<8x32xf32>
    %247 = arith.divf %245, %246 : vector<8x32xf32>
    %248 = vector.extract_strided_slice %241 {offsets = [0, 32], sizes = [8, 32], strides = [1, 1]} : vector<8x128xf32> to vector<8x32xf32>
    %249 = arith.negf %248 : vector<8x32xf32>
    %250 = math.exp %249 : vector<8x32xf32>
    %cst_67 = arith.constant 1.000000e+00 : f32
    %251 = vector.broadcast %cst_67 : f32 to vector<8x32xf32>
    %252 = arith.addf %251, %250 : vector<8x32xf32>
    %253 = arith.divf %251, %252 : vector<8x32xf32>
    %254 = vector.extract_strided_slice %241 {offsets = [0, 64], sizes = [8, 32], strides = [1, 1]} : vector<8x128xf32> to vector<8x32xf32>
    %255 = math.tanh %254 : vector<8x32xf32>
    %256 = vector.extract_strided_slice %241 {offsets = [0, 96], sizes = [8, 32], strides = [1, 1]} : vector<8x128xf32> to vector<8x32xf32>
    %257 = arith.negf %256 : vector<8x32xf32>
    %258 = math.exp %257 : vector<8x32xf32>
    %cst_68 = arith.constant 1.000000e+00 : f32
    %259 = vector.broadcast %cst_68 : f32 to vector<8x32xf32>
    %260 = arith.addf %259, %258 : vector<8x32xf32>
    %261 = arith.divf %259, %260 : vector<8x32xf32>
    %262 = arith.mulf %253, %232 : vector<8x32xf32>
    %263 = arith.mulf %247, %255 : vector<8x32xf32>
    %264 = arith.addf %262, %263 : vector<8x32xf32>
    %265 = math.tanh %264 : vector<8x32xf32>
    %266 = arith.mulf %261, %265 : vector<8x32xf32>
    %267 = arith.addf %266, %17 : vector<8x32xf32>
    %cst_69 = arith.constant 2.000000e+00 : f32
    %268 = vector.broadcast %cst_69 : f32 to vector<8x32xf32>
    %269 = arith.mulf %268, %267 : vector<8x32xf32>
    %c48_70 = arith.constant 48 : index
    %c0_71 = arith.constant 0 : index
    %270 = vector.load %arg7[%c48_70, %c0_71] : memref<64x32xf32, #tpu.memory_space<vmem>>, vector<8x32xf32>
    tpu.vector_store %arg7[%c48_70, %c0_71], %269 {strides = array<i32>} : memref<64x32xf32, #tpu.memory_space<vmem>>, vector<8x32xf32>,
    %271 = vector.extract_strided_slice %43 {offsets = [56, 0], sizes = [8, 128], strides = [1, 1]} : vector<64x128xf32> to vector<8x128xf32>
    %cst_72 = arith.constant dense<0.000000e+00> : vector<8x128xf32>
    %272 = tpu.matmul %266, %44, %cst_72 {dimension_numbers = #tpu.dot_dimension_numbers<[1], [0], [0], [1], [0, 0, 1, 1], [], []>} : vector<8x32xf32>, vector<32x128xf32>, vector<8x128xf32> -> vector<8x128xf32>
    %273 = arith.addf %271, %272 : vector<8x128xf32>
    %274 = vector.extract_strided_slice %273 {offsets = [0, 0], sizes = [8, 32], strides = [1, 1]} : vector<8x128xf32> to vector<8x32xf32>
    %275 = arith.negf %274 : vector<8x32xf32>
    %276 = math.exp %275 : vector<8x32xf32>
    %cst_73 = arith.constant 1.000000e+00 : f32
    %277 = vector.broadcast %cst_73 : f32 to vector<8x32xf32>
    %278 = arith.addf %277, %276 : vector<8x32xf32>
    %279 = arith.divf %277, %278 : vector<8x32xf32>
    %280 = vector.extract_strided_slice %273 {offsets = [0, 32], sizes = [8, 32], strides = [1, 1]} : vector<8x128xf32> to vector<8x32xf32>
    %281 = arith.negf %280 : vector<8x32xf32>
    %282 = math.exp %281 : vector<8x32xf32>
    %cst_74 = arith.constant 1.000000e+00 : f32
    %283 = vector.broadcast %cst_74 : f32 to vector<8x32xf32>
    %284 = arith.addf %283, %282 : vector<8x32xf32>
    %285 = arith.divf %283, %284 : vector<8x32xf32>
    %286 = vector.extract_strided_slice %273 {offsets = [0, 64], sizes = [8, 32], strides = [1, 1]} : vector<8x128xf32> to vector<8x32xf32>
    %287 = math.tanh %286 : vector<8x32xf32>
    %288 = vector.extract_strided_slice %273 {offsets = [0, 96], sizes = [8, 32], strides = [1, 1]} : vector<8x128xf32> to vector<8x32xf32>
    %289 = arith.negf %288 : vector<8x32xf32>
    %290 = math.exp %289 : vector<8x32xf32>
    %cst_75 = arith.constant 1.000000e+00 : f32
    %291 = vector.broadcast %cst_75 : f32 to vector<8x32xf32>
    %292 = arith.addf %291, %290 : vector<8x32xf32>
    %293 = arith.divf %291, %292 : vector<8x32xf32>
    %294 = arith.mulf %285, %264 : vector<8x32xf32>
    %295 = arith.mulf %279, %287 : vector<8x32xf32>
    %296 = arith.addf %294, %295 : vector<8x32xf32>
    %297 = math.tanh %296 : vector<8x32xf32>
    %298 = arith.mulf %293, %297 : vector<8x32xf32>
    %299 = arith.addf %298, %17 : vector<8x32xf32>
    %cst_76 = arith.constant 2.000000e+00 : f32
    %300 = vector.broadcast %cst_76 : f32 to vector<8x32xf32>
    %301 = arith.mulf %300, %299 : vector<8x32xf32>
    %c56 = arith.constant 56 : index
    %c0_77 = arith.constant 0 : index
    %302 = vector.load %arg7[%c56, %c0_77] : memref<64x32xf32, #tpu.memory_space<vmem>>, vector<8x32xf32>
    tpu.vector_store %arg7[%c56, %c0_77], %301 {strides = array<i32>} : memref<64x32xf32, #tpu.memory_space<vmem>>, vector<8x32xf32>,
    %c0_78 = arith.constant 0 : index
    %c0_79 = arith.constant 0 : index
    %c0_80 = arith.constant 0 : index
    %303 = vector.load %arg5[%c0_78, %c0_79, %c0_80] : memref<1x8x32xf32, #tpu.memory_space<vmem>>, vector<1x8x32xf32>
    %304 = vector.shape_cast %303 : vector<1x8x32xf32> to vector<8x32xf32>
    %305 = vector.shape_cast %298 : vector<8x32xf32> to vector<1x8x32xf32>
    tpu.vector_store %arg5[%c0_78, %c0_79, %c0_80], %305 {strides = array<i32>} : memref<1x8x32xf32, #tpu.memory_space<vmem>>, vector<1x8x32xf32>,
    %c0_81 = arith.constant 0 : index
    %c0_82 = arith.constant 0 : index
    %c0_83 = arith.constant 0 : index
    %306 = vector.load %arg6[%c0_81, %c0_82, %c0_83] : memref<1x8x32xf32, #tpu.memory_space<vmem>>, vector<1x8x32xf32>
    %307 = vector.shape_cast %306 : vector<1x8x32xf32> to vector<8x32xf32>
    %308 = vector.shape_cast %296 : vector<8x32xf32> to vector<1x8x32xf32>
    tpu.vector_store %arg6[%c0_81, %c0_82, %c0_83], %308 {strides = array<i32>} : memref<1x8x32xf32, #tpu.memory_space<vmem>>, vector<1x8x32xf32>,
    %c272 = arith.constant 272 : index
    %c0_84 = arith.constant 0 : index
    %309 = vector.load %arg2[%c272, %c0_84] : memref<304x128xf32, #tpu.memory_space<vmem>>, vector<32x32xf32>
    %c0_85 = arith.constant 0 : index
    %c0_86 = arith.constant 0 : index
    %310 = vector.load %arg7[%c0_85, %c0_86] : memref<64x32xf32, #tpu.memory_space<vmem>>, vector<64x32xf32>
    %cst_87 = arith.constant dense<0.000000e+00> : vector<64x32xf32>
    %311 = tpu.matmul %310, %309, %cst_87 {dimension_numbers = #tpu.dot_dimension_numbers<[1], [0], [0], [1], [0, 0, 1, 1], [], []>} : vector<64x32xf32>, vector<32x32xf32>, vector<64x32xf32> -> vector<64x32xf32>
    %312 = vector.broadcast %5 : vector<1x32xf32> to vector<64x32xf32>
    %313 = arith.addf %311, %312 : vector<64x32xf32>
    %cst_88 = arith.constant 0.000000e+00 : f32
    %314 = vector.broadcast %cst_88 : f32 to vector<64x32xf32>
    %315 = arith.cmpf oge, %313, %314 : vector<64x32xf32>
    %cst_89 = arith.constant 0.00999999977 : f32
    %316 = vector.broadcast %cst_89 : f32 to vector<64x32xf32>
    %317 = arith.mulf %316, %313 : vector<64x32xf32>
    %318 = arith.select %315, %313, %317 : vector<64x32xi1>, vector<64x32xf32>
    %319 = vector.broadcast %6 : vector<1x32xf32> to vector<64x32xf32>
    %320 = arith.mulf %318, %319 : vector<64x32xf32>
    %321 = vector.extract_strided_slice %320 {offsets = [0, 0], sizes = [8, 32], strides = [1, 1]} : vector<64x32xf32> to vector<8x32xf32>
    %cst_90 = arith.constant dense<0.000000e+00> : vector<8xf32>
    %322 = vector.multi_reduction <add>, %321, %cst_90 [1] : vector<8x32xf32> to vector<8xf32>
    %323 = vector.shape_cast %322 : vector<8xf32> to vector<8x1xf32>
    %324 = vector.extract_strided_slice %320 {offsets = [8, 0], sizes = [8, 32], strides = [1, 1]} : vector<64x32xf32> to vector<8x32xf32>
    %cst_91 = arith.constant dense<0.000000e+00> : vector<8xf32>
    %325 = vector.multi_reduction <add>, %324, %cst_91 [1] : vector<8x32xf32> to vector<8xf32>
    %326 = vector.shape_cast %325 : vector<8xf32> to vector<8x1xf32>
    %327 = vector.extract_strided_slice %320 {offsets = [16, 0], sizes = [8, 32], strides = [1, 1]} : vector<64x32xf32> to vector<8x32xf32>
    %cst_92 = arith.constant dense<0.000000e+00> : vector<8xf32>
    %328 = vector.multi_reduction <add>, %327, %cst_92 [1] : vector<8x32xf32> to vector<8xf32>
    %329 = vector.shape_cast %328 : vector<8xf32> to vector<8x1xf32>
    %330 = vector.extract_strided_slice %320 {offsets = [24, 0], sizes = [8, 32], strides = [1, 1]} : vector<64x32xf32> to vector<8x32xf32>
    %cst_93 = arith.constant dense<0.000000e+00> : vector<8xf32>
    %331 = vector.multi_reduction <add>, %330, %cst_93 [1] : vector<8x32xf32> to vector<8xf32>
    %332 = vector.shape_cast %331 : vector<8xf32> to vector<8x1xf32>
    %333 = vector.extract_strided_slice %320 {offsets = [32, 0], sizes = [8, 32], strides = [1, 1]} : vector<64x32xf32> to vector<8x32xf32>
    %cst_94 = arith.constant dense<0.000000e+00> : vector<8xf32>
    %334 = vector.multi_reduction <add>, %333, %cst_94 [1] : vector<8x32xf32> to vector<8xf32>
    %335 = vector.shape_cast %334 : vector<8xf32> to vector<8x1xf32>
    %336 = vector.extract_strided_slice %320 {offsets = [40, 0], sizes = [8, 32], strides = [1, 1]} : vector<64x32xf32> to vector<8x32xf32>
    %cst_95 = arith.constant dense<0.000000e+00> : vector<8xf32>
    %337 = vector.multi_reduction <add>, %336, %cst_95 [1] : vector<8x32xf32> to vector<8xf32>
    %338 = vector.shape_cast %337 : vector<8xf32> to vector<8x1xf32>
    %339 = vector.extract_strided_slice %320 {offsets = [48, 0], sizes = [8, 32], strides = [1, 1]} : vector<64x32xf32> to vector<8x32xf32>
    %cst_96 = arith.constant dense<0.000000e+00> : vector<8xf32>
    %340 = vector.multi_reduction <add>, %339, %cst_96 [1] : vector<8x32xf32> to vector<8xf32>
    %341 = vector.shape_cast %340 : vector<8xf32> to vector<8x1xf32>
    %342 = vector.extract_strided_slice %320 {offsets = [56, 0], sizes = [8, 32], strides = [1, 1]} : vector<64x32xf32> to vector<8x32xf32>
    %cst_97 = arith.constant dense<0.000000e+00> : vector<8xf32>
    %343 = vector.multi_reduction <add>, %342, %cst_97 [1] : vector<8x32xf32> to vector<8xf32>
    %344 = vector.shape_cast %343 : vector<8xf32> to vector<8x1xf32>
    %345 = tpu.concatenate %323, %326, %329, %332, %335, %338, %341, %344 in 1 : vector<8x1xf32>, vector<8x1xf32>, vector<8x1xf32>, vector<8x1xf32>, vector<8x1xf32>, vector<8x1xf32>, vector<8x1xf32>, vector<8x1xf32> -> vector<8x8xf32>
    %346 = vector.broadcast %7 : vector<1x1xf32> to vector<8x8xf32>
    %347 = arith.addf %345, %346 : vector<8x8xf32>
    %c0_98 = arith.constant 0 : index
    %c0_99 = arith.constant 0 : index
    %348 = vector.load %arg4[%c0_98, %c0_99] : memref<8x8xf32, #tpu.memory_space<vmem>>, vector<8x8xf32>
    tpu.vector_store %arg4[%c0_98, %c0_99], %347 {strides = array<i32>} : memref<8x8xf32, #tpu.memory_space<vmem>>, vector<8x8xf32>,
    return
  }
}

</mosaic_0001>

<llo_original>
// kernel: forward.1
$region0: #{forward.1}
  #allocation0 [shape = 'u32[]', space=smem, size = 0x4, offset = 0x4, fixed_abs, tag = 'smem constant byte address 0x4 - core index']
  #allocation1 [shape = 'u32[72,128]{1,0:T(1,128)}', space=vmem, size = 0x9000, scoped, tag = 'internal scratch']
  #allocation2 [shape = 'f32[64,32]{1,0:T(8,128)}', space=vmem, size = 0x8000, scoped, tag = 'scratch operand']
  %s0 = inlined_call_operand.vmem [shape: f32[64,42], index: 0, kind: input, shape index: {}]
  %s1 = inlined_call_operand.vmem [shape: f32[8,13], index: 1, kind: input, shape index: {}]
  %s2 = inlined_call_operand.hbm [shape: f32[304,128], index: 2, kind: input, shape index: {}]
  %s3 = inlined_call_operand.vmem [shape: f32[8,128], index: 3, kind: input, shape index: {}]
  %s4 = inlined_call_operand.hbm [shape: f32[8,8], index: 4, kind: output, shape index: {0}]
  %s5 = inlined_call_operand.hbm [shape: f32[1,8,32], index: 5, kind: output, shape index: {1}]
  %s6 = inlined_call_operand.hbm [shape: f32[1,8,32], index: 6, kind: output, shape index: {2}]
  %7 = xla_tuple %s4, %s5, %s6
  %s8 = sld [smem:[#allocation0]]
  $region46: #{forward.1} parent=0
    _
  %s10 = ssub.s32 1, %s8
  %s11 = scalar_select 0, %s10, %s8
  $region1: #{forward.1} parent=0
    #allocation3 [shape = 'u8[155648]{0}', space=vmem, size = 0x26000, scoped, tag = 'input window, operand 2, single buffered']
    #allocation4 [shape = 's32[1]{0}', space=sflag, size = 0x4, scoped, tag = 'scoped memory for forward.1']
    #allocation5 [shape = 's32[1]{0}', space=sflag, size = 0x4, scoped, tag = 'scoped memory for forward.1']
    #allocation6 [shape = 'u8[4096]{0}', space=vmem, size = 0x1000, scoped, tag = 'output window, operand 0, single buffered']
    #allocation7 [shape = 'u8[4096]{0}', space=vmem, size = 0x1000, scoped, tag = 'output window, operand 1, single buffered']
    #allocation8 [shape = 's32[1]{0}', space=sflag, size = 0x4, scoped, tag = 'scoped memory for forward.1']
    #allocation9 [shape = 'u8[4096]{0}', space=vmem, size = 0x1000, scoped, tag = 'output window, operand 2, single buffered']
    %12 = vsyncpa [#allocation4], 0
    %13 = vsyncpa [#allocation5], 0
    %14 = vsyncpa [#allocation8], 0
    // Predicated region
    $region2: #{forward.1} parent=1 // pred_check
      _
    $region3: #{forward.1} parent=1 // pred_check_branch
      %16 = sbr.rel (0) target = $region5
    $region4: #{forward.1} parent=1 // pred_region
      _
    $region5: #{forward.1} parent=1 // pred_fallthru
      _
    // Predicated region
    $region6: #{forward.1} parent=1 // pred_check
      _
    $region7: #{forward.1} parent=1 // pred_check_branch
      %18 = sbr.rel (0) target = $region9
    $region8: #{forward.1} parent=1 // pred_region
      _
    $region9: #{forward.1} parent=1 // pred_fallthru
      _
    // Predicated region
    $region10: #{forward.1} parent=1 // pred_check
      _
    $region11: #{forward.1} parent=1 // pred_check_branch
      %20 = sbr.rel (0) target = $region13
    $region12: #{forward.1} parent=1 // pred_region
      %22 = vsyncadd [#allocation4], 0
      %s23 = sshll.u32 %s2, 4
      %s24 = int_to_ptr.hbm [resolvable:$true] %s23
      %s25 = sshll.u32 [#allocation3], 4
      %s26 = int_to_ptr.vmem [resolvable:$true] %s25
      %31 = dma.hbm_to_vmem [thread:$0]  %s24, 4864, %s26, [#allocation4], 128, 128, 8
    $region13: #{forward.1} parent=1 // pred_fallthru
      _
    // Predicated region
    $region14: #{forward.1} parent=1 // pred_check
      _
    $region15: #{forward.1} parent=1 // pred_check_branch
      %33 = sbr.rel (0) target = $region17
    $region16: #{forward.1} parent=1 // pred_region
      _
    $region17: #{forward.1} parent=1 // pred_fallthru
      _
    // Predicated region
    $region18: #{forward.1} parent=1 // pred_check
      _
    $region19: #{forward.1} parent=1 // pred_check_branch
      %35 = sbr.rel (0) target = $region21
    $region20: #{forward.1} parent=1 // pred_region
      %37 = dma.done [#allocation4], 4864
    $region21: #{forward.1} parent=1 // pred_fallthru
      _
    %v38 = vld [vmem:[%s3] sm:$0x1]
    %v39 = vld [vmem:[%s3 + $0x1] sm:$0x1]
    %v40 = vld [vmem:[%s3 + $0x2] sm:$0x1]
    %v41 = vld [vmem:[%s3 + $0x3] sm:$0x1]
    %v42 = vld [vmem:[%s3 + $0x4] sm:$0x1]
    %v43 = vld [vmem:[%s3 + $0x5] sm:$0x1]
    %v44 = vld [vmem:[%s3 + $0x6] sm:$0x1]
    %v45 = vld [vmem:[%s3 + $0x7] sm:$0x1]
    %v46 = vld [vmem:[#allocation3 + $0x100] sm:$0xff]
    %v47 = vld [vmem:[#allocation3 + $0x108] sm:$0x1f]
    %v48 = vld [vmem:[%s1] sm:$0xff]
    %v49 = vperm.slane %v42, 0
    %vm50 = vcmask 105472
    %v52 = vsel %vm50, %v48, 0
    %vm54 = vcmask 1044480
    %v56 = vsel %vm54, %v47, 0
    %58 = vmatpush.msra.mxu0 0.0
    %59 = vmatpush.msra.mxu0 0.0
    %60 = vmatpush.msra.mxu0 0.0
    %61 = vmatpush.msra.mxu0 0.0
    %62 = vmatpush.msra.mxu0 0.0
    %63 = vmatpush.msra.mxu0 0.0
    %64 = vmatpush.msra.mxu0 0.0
    %65 = vmatpush.msra.mxu0 0.0
    %66 = vmatpush.msra.mxu0 0.0
    %67 = vmatpush.msra.mxu0 0.0
    %68 = vmatpush.msra.mxu0 0.0
    %69 = vmatpush.msra.mxu0 0.0
    %70 = vmatpush.msra.mxu0 0.0
    %71 = vmatpush.msra.mxu0 0.0
    %72 = vmatpush.msra.mxu0 %v56
    %73 = vmatpush.msra.mxu0 %v46
    %74 = vmatmul.f32.gmra.mxu0 %v52
    %v75 = vpop.f32.mrf.mxu0
    %v76 = vadd.f32 %v49, %v75
    %77 = vdwg.mxu0
    %vm78 = vcmp.ge.f32.partialorder %v76, 0.0
    %v79 = vmul.f32 %v76, 0.01
    %v80 = vsel %vm78, %v76, %v79
    %v81 = vld [vmem:[%s0] sm:$0xff]
    %v82 = vld [vmem:[%s0 + $0x8] sm:$0xff]
    %v83 = vld [vmem:[%s0 + $0x10] sm:$0xff]
    %v84 = vld [vmem:[%s0 + $0x18] sm:$0xff]
    %v85 = vld [vmem:[%s0 + $0x20] sm:$0xff]
    %v86 = vld [vmem:[%s0 + $0x28] sm:$0xff]
    %v87 = vld [vmem:[%s0 + $0x30] sm:$0xff]
    %v88 = vld [vmem:[%s0 + $0x38] sm:$0xff]
    %v89 = vld [vmem:[#allocation3] sm:$0xff]
    %v90 = vld [vmem:[#allocation3 + $0x8] sm:$0xff]
    %v91 = vld [vmem:[#allocation3 + $0x10] sm:$0xff]
    %v92 = vld [vmem:[#allocation3 + $0x18] sm:$0xff]
    %v93 = vld [vmem:[#allocation3 + $0x20] sm:$0xff]
    %v94 = vld [vmem:[#allocation3 + $0x28] sm:$0x3]
    %v95 = vld [vmem:[#allocation3 + $0x80] sm:$0xff]
    %v96 = vld [vmem:[#allocation3 + $0x88] sm:$0xff]
    %v97 = vld [vmem:[#allocation3 + $0x90] sm:$0xff]
    %v98 = vld [vmem:[#allocation3 + $0x98] sm:$0xff]
    %v99 = vld [vmem:[#allocation3 + $0xa0] sm:$0xff]
    %v100 = vld [vmem:[#allocation3 + $0xa8] sm:$0xff]
    %v101 = vld [vmem:[#allocation3 + $0xb0] sm:$0xff]
    %v102 = vld [vmem:[#allocation3 + $0xb8] sm:$0xff]
    %v103 = vld [vmem:[#allocation3 + $0xc0] sm:$0xff]
    %v104 = vld [vmem:[#allocation3 + $0xc8] sm:$0xff]
    %v105 = vld [vmem:[#allocation3 + $0xd0] sm:$0xff]
    %v106 = vld [vmem:[#allocation3 + $0xd8] sm:$0xff]
    %v107 = vld [vmem:[#allocation3 + $0xe0] sm:$0xff]
    %v108 = vld [vmem:[#allocation3 + $0xe8] sm:$0xff]
    %v109 = vld [vmem:[#allocation3 + $0xf0] sm:$0xff]
    %v110 = vld [vmem:[#allocation3 + $0xf8] sm:$0xff]
    %v111 = vperm.slane %v38, 0
    %vm112 = vcmask 343040
    %v114 = vsel %vm112, %v81, 0
    %v117 = vsel %vm112, %v82, 0
    %v120 = vsel %vm112, %v83, 0
    %v123 = vsel %vm112, %v84, 0
    %v126 = vsel %vm112, %v85, 0
    %v129 = vsel %vm112, %v86, 0
    %v132 = vsel %vm112, %v87, 0
    %v135 = vsel %vm112, %v88, 0
    %vm137 = vcmask 1041408
    %v139 = vsel %vm137, %v94, 0
    %141 = vmatpush.msra.mxu0 0.0
    %142 = vmatpush.msra.mxu0 0.0
    %143 = vmatpush.msra.mxu0 0.0
    %144 = vmatpush.msra.mxu0 0.0
    %145 = vmatpush.msra.mxu0 0.0
    %146 = vmatpush.msra.mxu0 0.0
    %147 = vmatpush.msra.mxu0 0.0
    %148 = vmatpush.msra.mxu0 0.0
    %149 = vmatpush.msra.mxu0 0.0
    %150 = vmatpush.msra.mxu0 0.0
    %151 = vmatpush.msra.mxu0 %v139
    %152 = vmatpush.msra.mxu0 %v93
    %153 = vmatpush.msra.mxu0 %v92
    %154 = vmatpush.msra.mxu0 %v91
    %155 = vmatpush.msra.mxu0 %v90
    %156 = vmatpush.msra.mxu0 %v89
    %157 = vmatmul.f32.gmra.mxu0 %v114
    %v158 = vpop.f32.mrf.mxu0
    %v159 = vadd.f32 %v111, %v158
    %160 = vmatmul.f32.gmra.mxu0 %v117
    %v161 = vpop.f32.mrf.mxu0
    %v162 = vadd.f32 %v111, %v161
    %163 = vmatmul.f32.gmra.mxu0 %v120
    %v164 = vpop.f32.mrf.mxu0
    %v165 = vadd.f32 %v111, %v164
    %166 = vmatmul.f32.gmra.mxu0 %v123
    %v167 = vpop.f32.mrf.mxu0
    %v168 = vadd.f32 %v111, %v167
    %169 = vmatmul.f32.gmra.mxu0 %v126
    %v170 = vpop.f32.mrf.mxu0
    %v171 = vadd.f32 %v111, %v170
    %172 = vmatmul.f32.gmra.mxu0 %v129
    %v173 = vpop.f32.mrf.mxu0
    %v174 = vadd.f32 %v111, %v173
    %175 = vmatmul.f32.gmra.mxu0 %v132
    %v176 = vpop.f32.mrf.mxu0
    %v177 = vadd.f32 %v111, %v176
    %178 = vmatmul.f32.gmra.mxu0 %v135
    %v179 = vpop.f32.mrf.mxu0
    %v180 = vadd.f32 %v111, %v179
    %181 = vdwg.mxu0
    %vm182 = vcmp.ge.f32.partialorder %v159, 0.0
    %vm183 = vcmp.ge.f32.partialorder %v162, 0.0
    %vm184 = vcmp.ge.f32.partialorder %v165, 0.0
    %vm185 = vcmp.ge.f32.partialorder %v168, 0.0
    %vm186 = vcmp.ge.f32.partialorder %v171, 0.0
    %vm187 = vcmp.ge.f32.partialorder %v174, 0.0
    %vm188 = vcmp.ge.f32.partialorder %v177, 0.0
    %vm189 = vcmp.ge.f32.partialorder %v180, 0.0
    %v190 = vmul.f32 %v159, 0.01
    %v191 = vmul.f32 %v162, 0.01
    %v192 = vmul.f32 %v165, 0.01
    %v193 = vmul.f32 %v168, 0.01
    %v194 = vmul.f32 %v171, 0.01
    %v195 = vmul.f32 %v174, 0.01
    %v196 = vmul.f32 %v177, 0.01
    %v197 = vmul.f32 %v180, 0.01
    %v198 = vsel %vm182, %v159, %v190
    %v199 = vsel %vm183, %v162, %v191
    %v200 = vsel %vm184, %v165, %v192
    %v201 = vsel %vm185, %v168, %v193
    %v202 = vsel %vm186, %v171, %v194
    %v203 = vsel %vm187, %v174, %v195
    %v204 = vsel %vm188, %v177, %v196
    %v205 = vsel %vm189, %v180, %v197
    %v206 = vperm.slane %v40, 0
    %207 = vmatpush.msra.mxu0 %v110
    %208 = vmatpush.msra.mxu0 %v109
    %209 = vmatpush.msra.mxu0 %v108
    %210 = vmatpush.msra.mxu0 %v107
    %211 = vmatpush.msra.mxu0 %v106
    %212 = vmatpush.msra.mxu0 %v105
    %213 = vmatpush.msra.mxu0 %v104
    %214 = vmatpush.msra.mxu0 %v103
    %215 = vmatpush.msra.mxu0 %v102
    %216 = vmatpush.msra.mxu0 %v101
    %217 = vmatpush.msra.mxu0 %v100
    %218 = vmatpush.msra.mxu0 %v99
    %219 = vmatpush.msra.mxu0 %v98
    %220 = vmatpush.msra.mxu0 %v97
    %221 = vmatpush.msra.mxu0 %v96
    %222 = vmatpush.msra.mxu0 %v95
    %223 = vmatmul.f32.gmra.mxu0 %v198
    %v224 = vpop.f32.mrf.mxu0
    %v225 = vadd.f32 %v206, %v224
    %226 = vmatmul.f32.gmra.mxu0 %v199
    %v227 = vpop.f32.mrf.mxu0
    %v228 = vadd.f32 %v206, %v227
    %229 = vmatmul.f32.gmra.mxu0 %v200
    %v230 = vpop.f32.mrf.mxu0
    %v231 = vadd.f32 %v206, %v230
    %232 = vmatmul.f32.gmra.mxu0 %v201
    %v233 = vpop.f32.mrf.mxu0
    %v234 = vadd.f32 %v206, %v233
    %235 = vmatmul.f32.gmra.mxu0 %v202
    %v236 = vpop.f32.mrf.mxu0
    %v237 = vadd.f32 %v206, %v236
    %238 = vmatmul.f32.gmra.mxu0 %v203
    %v239 = vpop.f32.mrf.mxu0
    %v240 = vadd.f32 %v206, %v239
    %241 = vmatmul.f32.gmra.mxu0 %v204
    %v242 = vpop.f32.mrf.mxu0
    %v243 = vadd.f32 %v206, %v242
    %244 = vmatmul.f32.gmra.mxu0 %v205
    %v245 = vpop.f32.mrf.mxu0
    %v246 = vadd.f32 %v206, %v245
    %247 = vdwg.mxu0
    %v248 = vxor.u32 %v225, 2147483648
    %v249 = vxor.u32 %v228, 2147483648
    %v250 = vxor.u32 %v231, 2147483648
    %v251 = vxor.u32 %v234, 2147483648
    %v252 = vxor.u32 %v237, 2147483648
    %v253 = vxor.u32 %v240, 2147483648
    %v254 = vxor.u32 %v243, 2147483648
    %v255 = vxor.u32 %v246, 2147483648
    %v256 = vmul.f32 %v248, 1.442695
    %v257 = vpow.pop %v256
    %v258 = vmul.f32 %v249, 1.442695
    %v259 = vpow.pop %v258
    %v260 = vmul.f32 %v250, 1.442695
    %v261 = vpow.pop %v260
    %v262 = vmul.f32 %v251, 1.442695
    %v263 = vpow.pop %v262
    %v264 = vmul.f32 %v252, 1.442695
    %v265 = vpow.pop %v264
    %v266 = vmul.f32 %v253, 1.442695
    %v267 = vpow.pop %v266
    %v268 = vmul.f32 %v254, 1.442695
    %v269 = vpow.pop %v268
    %v270 = vmul.f32 %v255, 1.442695
    %v271 = vpow.pop %v270
    %v272 = vadd.f32 %v257, 1.0
    %v273 = vadd.f32 %v259, 1.0
    %v274 = vadd.f32 %v261, 1.0
    %v275 = vadd.f32 %v263, 1.0
    %v276 = vadd.f32 %v265, 1.0
    %v277 = vadd.f32 %v267, 1.0
    %v278 = vadd.f32 %v269, 1.0
    %v279 = vadd.f32 %v271, 1.0
    %v280 = vrcp.pop %v272
    %v281 = vmul.f32 %v272, %v280
    %v282 = vsub.f32 1.0, %v281
    %v283 = vmul.f32 %v280, %v282
    %v284 = vadd.f32 %v280, %v283
    %vm285 = vweird.f32 %v272
    %vm286 = vweird.f32 %v280
    %vm287 = vmor %vm285, %vm286
    %v288 = vsel %vm287, %v280, %v284
    %v289 = vand.u32 2147483647, %v272
    %vm290 = vcmp.eq.f32.partialorder %v289, 8.507059e+37
    %v291 = vand.u32 %v272, 2147483648
    %v292 = vor.u32 1.1754944e-38, %v291
    %v293 = vsel %vm290, %v292, %v288
    %v294 = vmul.f32 1.0, %v293
    %v295 = vrcp.pop %v273
    %v296 = vmul.f32 %v273, %v295
    %v297 = vsub.f32 1.0, %v296
    %v298 = vmul.f32 %v295, %v297
    %v299 = vadd.f32 %v295, %v298
    %vm300 = vweird.f32 %v273
    %vm301 = vweird.f32 %v295
    %vm302 = vmor %vm300, %vm301
    %v303 = vsel %vm302, %v295, %v299
    %v304 = vand.u32 2147483647, %v273
    %vm305 = vcmp.eq.f32.partialorder %v304, 8.507059e+37
    %v306 = vand.u32 %v273, 2147483648
    %v307 = vor.u32 1.1754944e-38, %v306
    %v308 = vsel %vm305, %v307, %v303
    %v309 = vmul.f32 1.0, %v308
    %v310 = vrcp.pop %v274
    %v311 = vmul.f32 %v274, %v310
    %v312 = vsub.f32 1.0, %v311
    %v313 = vmul.f32 %v310, %v312
    %v314 = vadd.f32 %v310, %v313
    %vm315 = vweird.f32 %v274
    %vm316 = vweird.f32 %v310
    %vm317 = vmor %vm315, %vm316
    %v318 = vsel %vm317, %v310, %v314
    %v319 = vand.u32 2147483647, %v274
    %vm320 = vcmp.eq.f32.partialorder %v319, 8.507059e+37
    %v321 = vand.u32 %v274, 2147483648
    %v322 = vor.u32 1.1754944e-38, %v321
    %v323 = vsel %vm320, %v322, %v318
    %v324 = vmul.f32 1.0, %v323
    %v325 = vrcp.pop %v275
    %v326 = vmul.f32 %v275, %v325
    %v327 = vsub.f32 1.0, %v326
    %v328 = vmul.f32 %v325, %v327
    %v329 = vadd.f32 %v325, %v328
    %vm330 = vweird.f32 %v275
    %vm331 = vweird.f32 %v325
    %vm332 = vmor %vm330, %vm331
    %v333 = vsel %vm332, %v325, %v329
    %v334 = vand.u32 2147483647, %v275
    %vm335 = vcmp.eq.f32.partialorder %v334, 8.507059e+37
    %v336 = vand.u32 %v275, 2147483648
    %v337 = vor.u32 1.1754944e-38, %v336
    %v338 = vsel %vm335, %v337, %v333
    %v339 = vmul.f32 1.0, %v338
    %v340 = vrcp.pop %v276
    %v341 = vmul.f32 %v276, %v340
    %v342 = vsub.f32 1.0, %v341
    %v343 = vmul.f32 %v340, %v342
    %v344 = vadd.f32 %v340, %v343
    %vm345 = vweird.f32 %v276
    %vm346 = vweird.f32 %v340
    %vm347 = vmor %vm345, %vm346
    %v348 = vsel %vm347, %v340, %v344
    %v349 = vand.u32 2147483647, %v276
    %vm350 = vcmp.eq.f32.partialorder %v349, 8.507059e+37
    %v351 = vand.u32 %v276, 2147483648
    %v352 = vor.u32 1.1754944e-38, %v351
    %v353 = vsel %vm350, %v352, %v348
    %v354 = vmul.f32 1.0, %v353
    %v355 = vrcp.pop %v277
    %v356 = vmul.f32 %v277, %v355
    %v357 = vsub.f32 1.0, %v356
    %v358 = vmul.f32 %v355, %v357
    %v359 = vadd.f32 %v355, %v358
    %vm360 = vweird.f32 %v277
    %vm361 = vweird.f32 %v355
    %vm362 = vmor %vm360, %vm361
    %v363 = vsel %vm362, %v355, %v359
    %v364 = vand.u32 2147483647, %v277
    %vm365 = vcmp.eq.f32.partialorder %v364, 8.507059e+37
    %v366 = vand.u32 %v277, 2147483648
    %v367 = vor.u32 1.1754944e-38, %v366
    %v368 = vsel %vm365, %v367, %v363
    %v369 = vmul.f32 1.0, %v368
    %v370 = vrcp.pop %v278
    %v371 = vmul.f32 %v278, %v370
    %v372 = vsub.f32 1.0, %v371
    %v373 = vmul.f32 %v370, %v372
    %v374 = vadd.f32 %v370, %v373
    %vm375 = vweird.f32 %v278
    %vm376 = vweird.f32 %v370
    %vm377 = vmor %vm375, %vm376
    %v378 = vsel %vm377, %v370, %v374
    %v379 = vand.u32 2147483647, %v278
    %vm380 = vcmp.eq.f32.partialorder %v379, 8.507059e+37
    %v381 = vand.u32 %v278, 2147483648
    %v382 = vor.u32 1.1754944e-38, %v381
    %v383 = vsel %vm380, %v382, %v378
    %v384 = vmul.f32 1.0, %v383
    %v385 = vrcp.pop %v279
    %v386 = vmul.f32 %v279, %v385
    %v387 = vsub.f32 1.0, %v386
    %v388 = vmul.f32 %v385, %v387
    %v389 = vadd.f32 %v385, %v388
    %vm390 = vweird.f32 %v279
    %vm391 = vweird.f32 %v385
    %vm392 = vmor %vm390, %vm391
    %v393 = vsel %vm392, %v385, %v389
    %v394 = vand.u32 2147483647, %v279
    %vm395 = vcmp.eq.f32.partialorder %v394, 8.507059e+37
    %v396 = vand.u32 %v279, 2147483648
    %v397 = vor.u32 1.1754944e-38, %v396
    %v398 = vsel %vm395, %v397, %v393
    %v399 = vmul.f32 1.0, %v398
    %v400 = vperm.slane %v41, 0
    %v401 = vmul.f32 %v400, %v294
    %v402 = vmul.f32 %v400, %v309
    %v403 = vmul.f32 %v400, %v324
    %v404 = vmul.f32 %v400, %v339
    %v405 = vmul.f32 %v400, %v354
    %v406 = vmul.f32 %v400, %v369
    %v407 = vmul.f32 %v400, %v384
    %v408 = vmul.f32 %v400, %v399
    %v409 = vmul.f32 %v401, %v81
    %v410 = vmul.f32 %v402, %v82
    %v411 = vmul.f32 %v403, %v83
    %v412 = vmul.f32 %v404, %v84
    %v413 = vmul.f32 %v405, %v85
    %v414 = vmul.f32 %v406, %v86
    %v415 = vmul.f32 %v407, %v87
    %v416 = vmul.f32 %v408, %v88
    %v417 = vld [vmem:[#allocation3 + $0x30] sm:$0xff]
    %v418 = vld [vmem:[#allocation3 + $0x38] sm:$0xff]
    %v419 = vld [vmem:[#allocation3 + $0x40] sm:$0xff]
    %v420 = vld [vmem:[#allocation3 + $0x48] sm:$0xff]
    %v421 = vld [vmem:[#allocation3 + $0x50] sm:$0xff]
    %v422 = vld [vmem:[#allocation3 + $0x58] sm:$0x3]
    %v423 = vperm.slane %v39, 0
    %v425 = vsel %vm112, %v409, 0
    %v428 = vsel %vm112, %v410, 0
    %v431 = vsel %vm112, %v411, 0
    %v434 = vsel %vm112, %v412, 0
    %v437 = vsel %vm112, %v413, 0
    %v440 = vsel %vm112, %v414, 0
    %v443 = vsel %vm112, %v415, 0
    %v446 = vsel %vm112, %v416, 0
    %v449 = vsel %vm137, %v422, 0
    %451 = vmatpush.msra.mxu0 0.0
    %452 = vmatpush.msra.mxu0 0.0
    %453 = vmatpush.msra.mxu0 0.0
    %454 = vmatpush.msra.mxu0 0.0
    %455 = vmatpush.msra.mxu0 0.0
    %456 = vmatpush.msra.mxu0 0.0
    %457 = vmatpush.msra.mxu0 0.0
    %458 = vmatpush.msra.mxu0 0.0
    %459 = vmatpush.msra.mxu0 0.0
    %460 = vmatpush.msra.mxu0 0.0
    %461 = vmatpush.msra.mxu0 %v449
    %462 = vmatpush.msra.mxu0 %v421
    %463 = vmatpush.msra.mxu0 %v420
    %464 = vmatpush.msra.mxu0 %v419
    %465 = vmatpush.msra.mxu0 %v418
    %466 = vmatpush.msra.mxu0 %v417
    %467 = vmatmul.f32.gmra.mxu0 %v425
    %v468 = vpop.f32.mrf.mxu0
    %v469 = vadd.f32 %v423, %v468
    %470 = vmatmul.f32.gmra.mxu0 %v428
    %v471 = vpop.f32.mrf.mxu0
    %v472 = vadd.f32 %v423, %v471
    %473 = vmatmul.f32.gmra.mxu0 %v431
    %v474 = vpop.f32.mrf.mxu0
    %v475 = vadd.f32 %v423, %v474
    %476 = vmatmul.f32.gmra.mxu0 %v434
    %v477 = vpop.f32.mrf.mxu0
    %v478 = vadd.f32 %v423, %v477
    %479 = vmatmul.f32.gmra.mxu0 %v437
    %v480 = vpop.f32.mrf.mxu0
    %v481 = vadd.f32 %v423, %v480
    %482 = vmatmul.f32.gmra.mxu0 %v440
    %v483 = vpop.f32.mrf.mxu0
    %v484 = vadd.f32 %v423, %v483
    %485 = vmatmul.f32.gmra.mxu0 %v443
    %v486 = vpop.f32.mrf.mxu0
    %v487 = vadd.f32 %v423, %v486
    %488 = vmatmul.f32.gmra.mxu0 %v446
    %v489 = vpop.f32.mrf.mxu0
    %v490 = vadd.f32 %v423, %v489
    %491 = vdwg.mxu0
    %v492 = vld [vmem:[#allocation3 + $0x60] sm:$0xff]
    %v493 = vld [vmem:[#allocation3 + $0x68] sm:$0xff]
    %v494 = vld [vmem:[#allocation3 + $0x70] sm:$0xff]
    %v495 = vld [vmem:[#allocation3 + $0x78] sm:$0xff]
    %vm496 = vcmask 261120
    %v498 = vsel %vm496, 0.0, 0
    %500 = vmatpush.msra.mxu0 0.0
    %501 = vmatpush.msra.mxu0 0.0
    %502 = vmatpush.msra.mxu0 0.0
    %503 = vmatpush.msra.mxu0 0.0
    %504 = vmatpush.msra.mxu0 0.0
    %505 = vmatpush.msra.mxu0 0.0
    %506 = vmatpush.msra.mxu0 0.0
    %507 = vmatpush.msra.mxu0 0.0
    %508 = vmatpush.msra.mxu0 0.0
    %509 = vmatpush.msra.mxu0 0.0
    %510 = vmatpush.msra.mxu0 0.0
    %511 = vmatpush.msra.mxu0 0.0
    %512 = vmatpush.msra.mxu0 %v495
    %513 = vmatpush.msra.mxu0 %v494
    %514 = vmatpush.msra.mxu0 %v493
    %515 = vmatpush.msra.mxu0 %v492
    %516 = vmatmul.f32.gmra.mxu0 %v498
    %v517 = vpop.f32.mrf.mxu0
    %v518 = vadd.f32 0.0, %v517
    %519 = vdwg.mxu0
    %v520 = vadd.f32 %v469, %v518
    %v521 = vxor.u32 %v520, 2147483648
    %v522 = vmul.f32 %v521, 1.442695
    %v523 = vpow.pop %v522
    %v524 = vadd.f32 %v523, 1.0
    %v525 = vrcp.pop %v524
    %v526 = vmul.f32 %v524, %v525
    %v527 = vsub.f32 1.0, %v526
    %v528 = vmul.f32 %v525, %v527
    %v529 = vadd.f32 %v525, %v528
    %vm530 = vweird.f32 %v524
    %vm531 = vweird.f32 %v525
    %vm532 = vmor %vm530, %vm531
    %v533 = vsel %vm532, %v525, %v529
    %v534 = vand.u32 2147483647, %v524
    %vm535 = vcmp.eq.f32.partialorder %v534, 8.507059e+37
    %v536 = vand.u32 %v524, 2147483648
    %v537 = vor.u32 1.1754944e-38, %v536
    %v538 = vsel %vm535, %v537, %v533
    %v539 = vmul.f32 1.0, %v538
    %v540 = vtanh.pop %v520
    %v541 = vmul.f32 %v539, 0.0
    %543 = vrot.lane.b32.xlu0 %v540, 64
    %v544 = vpop.permute.xlu0 %543
    %v546 = vmul.f32 %v539, %v544
    %548 = vrot.lane.b32.xlu0 %v546, 32
    %v549 = vpop.permute.xlu0 %548
    %v551 = vadd.f32 %v541, %v549
    %v552 = vtanh.pop %v551
    %554 = vrot.lane.b32.xlu0 %v552, 64
    %v555 = vpop.permute.xlu0 %554
    %v557 = vmul.f32 %v539, %v555
    %559 = vrot.lane.b32.xlu0 %v80, 96
    %v560 = vpop.permute.xlu0 %559
    %v562 = vadd.f32 %v557, %v560
    %v563 = vmul.f32 %v562, 2.0
    %565 = vrot.lane.b32.xlu0 %v563, 32
    %v566 = vpop.permute.xlu0 %565
    %568 = vst.msk [vmem:[#allocation2] sm:$0xff] %vm496, %v566
    %570 = vrot.lane.b32.xlu0 %v557, 32
    %v571 = vpop.permute.xlu0 %570
    %v572 = vsel %vm496, %v571, 0
    %574 = vmatpush.msra.mxu0 0.0
    %575 = vmatpush.msra.mxu0 0.0
    %576 = vmatpush.msra.mxu0 0.0
    %577 = vmatpush.msra.mxu0 0.0
    %578 = vmatpush.msra.mxu0 0.0
    %579 = vmatpush.msra.mxu0 0.0
    %580 = vmatpush.msra.mxu0 0.0
    %581 = vmatpush.msra.mxu0 0.0
    %582 = vmatpush.msra.mxu0 0.0
    %583 = vmatpush.msra.mxu0 0.0
    %584 = vmatpush.msra.mxu0 0.0
    %585 = vmatpush.msra.mxu0 0.0
    %586 = vmatpush.msra.mxu0 %v495
    %587 = vmatpush.msra.mxu0 %v494
    %588 = vmatpush.msra.mxu0 %v493
    %589 = vmatpush.msra.mxu0 %v492
    %590 = vmatmul.f32.gmra.mxu0 %v572
    %v591 = vpop.f32.mrf.mxu0
    %v592 = vadd.f32 0.0, %v591
    %593 = vdwg.mxu0
    %v594 = vadd.f32 %v472, %v592
    %v595 = vxor.u32 %v594, 2147483648
    %v596 = vmul.f32 %v595, 1.442695
    %v597 = vpow.pop %v596
    %v598 = vadd.f32 %v597, 1.0
    %v599 = vrcp.pop %v598
    %v600 = vmul.f32 %v598, %v599
    %v601 = vsub.f32 1.0, %v600
    %v602 = vmul.f32 %v599, %v601
    %v603 = vadd.f32 %v599, %v602
    %vm604 = vweird.f32 %v598
    %vm605 = vweird.f32 %v599
    %vm606 = vmor %vm604, %vm605
    %v607 = vsel %vm606, %v599, %v603
    %v608 = vand.u32 2147483647, %v598
    %vm609 = vcmp.eq.f32.partialorder %v608, 8.507059e+37
    %v610 = vand.u32 %v598, 2147483648
    %v611 = vor.u32 1.1754944e-38, %v610
    %v612 = vsel %vm609, %v611, %v607
    %v613 = vmul.f32 1.0, %v612
    %v614 = vtanh.pop %v594
    %v615 = vmul.f32 %v613, %v551
    %617 = vrot.lane.b32.xlu0 %v614, 64
    %v618 = vpop.permute.xlu0 %617
    %v620 = vmul.f32 %v613, %v618
    %622 = vrot.lane.b32.xlu0 %v620, 32
    %v623 = vpop.permute.xlu0 %622
    %v625 = vadd.f32 %v615, %v623
    %v626 = vtanh.pop %v625
    %628 = vrot.lane.b32.xlu0 %v626, 64
    %v629 = vpop.permute.xlu0 %628
    %v631 = vmul.f32 %v613, %v629
    %v632 = vadd.f32 %v631, %v560
    %v633 = vmul.f32 %v632, 2.0
    %635 = vrot.lane.b32.xlu0 %v633, 32
    %v636 = vpop.permute.xlu0 %635
    %638 = vst.msk [vmem:[#allocation2 + $0x8] sm:$0xff] %vm496, %v636
    %640 = vrot.lane.b32.xlu0 %v631, 32
    %v641 = vpop.permute.xlu0 %640
    %v642 = vsel %vm496, %v641, 0
    %644 = vmatpush.msra.mxu0 0.0
    %645 = vmatpush.msra.mxu0 0.0
    %646 = vmatpush.msra.mxu0 0.0
    %647 = vmatpush.msra.mxu0 0.0
    %648 = vmatpush.msra.mxu0 0.0
    %649 = vmatpush.msra.mxu0 0.0
    %650 = vmatpush.msra.mxu0 0.0
    %651 = vmatpush.msra.mxu0 0.0
    %652 = vmatpush.msra.mxu0 0.0
    %653 = vmatpush.msra.mxu0 0.0
    %654 = vmatpush.msra.mxu0 0.0
    %655 = vmatpush.msra.mxu0 0.0
    %656 = vmatpush.msra.mxu0 %v495
    %657 = vmatpush.msra.mxu0 %v494
    %658 = vmatpush.msra.mxu0 %v493
    %659 = vmatpush.msra.mxu0 %v492
    %660 = vmatmul.f32.gmra.mxu0 %v642
    %v661 = vpop.f32.mrf.mxu0
    %v662 = vadd.f32 0.0, %v661
    %663 = vdwg.mxu0
    %v664 = vadd.f32 %v475, %v662
    %v665 = vxor.u32 %v664, 2147483648
    %v666 = vmul.f32 %v665, 1.442695
    %v667 = vpow.pop %v666
    %v668 = vadd.f32 %v667, 1.0
    %v669 = vrcp.pop %v668
    %v670 = vmul.f32 %v668, %v669
    %v671 = vsub.f32 1.0, %v670
    %v672 = vmul.f32 %v669, %v671
    %v673 = vadd.f32 %v669, %v672
    %vm674 = vweird.f32 %v668
    %vm675 = vweird.f32 %v669
    %vm676 = vmor %vm674, %vm675
    %v677 = vsel %vm676, %v669, %v673
    %v678 = vand.u32 2147483647, %v668
    %vm679 = vcmp.eq.f32.partialorder %v678, 8.507059e+37
    %v680 = vand.u32 %v668, 2147483648
    %v681 = vor.u32 1.1754944e-38, %v680
    %v682 = vsel %vm679, %v681, %v677
    %v683 = vmul.f32 1.0, %v682
    %v684 = vtanh.pop %v664
    %v685 = vmul.f32 %v683, %v625
    %687 = vrot.lane.b32.xlu0 %v684, 64
    %v688 = vpop.permute.xlu0 %687
    %v690 = vmul.f32 %v683, %v688
    %692 = vrot.lane.b32.xlu0 %v690, 32
    %v693 = vpop.permute.xlu0 %692
    %v695 = vadd.f32 %v685, %v693
    %v696 = vtanh.pop %v695
    %698 = vrot.lane.b32.xlu0 %v696, 64
    %v699 = vpop.permute.xlu0 %698
    %v701 = vmul.f32 %v683, %v699
    %v702 = vadd.f32 %v701, %v560
    %v703 = vmul.f32 %v702, 2.0
    %705 = vrot.lane.b32.xlu0 %v703, 32
    %v706 = vpop.permute.xlu0 %705
    %708 = vst.msk [vmem:[#allocation2 + $0x10] sm:$0xff] %vm496, %v706
    %710 = vrot.lane.b32.xlu0 %v701, 32
    %v711 = vpop.permute.xlu0 %710
    %v712 = vsel %vm496, %v711, 0
    %714 = vmatpush.msra.mxu0 0.0
    %715 = vmatpush.msra.mxu0 0.0
    %716 = vmatpush.msra.mxu0 0.0
    %717 = vmatpush.msra.mxu0 0.0
    %718 = vmatpush.msra.mxu0 0.0
    %719 = vmatpush.msra.mxu0 0.0
    %720 = vmatpush.msra.mxu0 0.0
    %721 = vmatpush.msra.mxu0 0.0
    %722 = vmatpush.msra.mxu0 0.0
    %723 = vmatpush.msra.mxu0 0.0
    %724 = vmatpush.msra.mxu0 0.0
    %725 = vmatpush.msra.mxu0 0.0
    %726 = vmatpush.msra.mxu0 %v495
    %727 = vmatpush.msra.mxu0 %v494
    %728 = vmatpush.msra.mxu0 %v493
    %729 = vmatpush.msra.mxu0 %v492
    %730 = vmatmul.f32.gmra.mxu0 %v712
    %v731 = vpop.f32.mrf.mxu0
    %v732 = vadd.f32 0.0, %v731
    %733 = vdwg.mxu0
    %v734 = vadd.f32 %v478, %v732
    %v735 = vxor.u32 %v734, 2147483648
    %v736 = vmul.f32 %v735, 1.442695
    %v737 = vpow.pop %v736
    %v738 = vadd.f32 %v737, 1.0
    %v739 = vrcp.pop %v738
    %v740 = vmul.f32 %v738, %v739
    %v741 = vsub.f32 1.0, %v740
    %v742 = vmul.f32 %v739, %v741
    %v743 = vadd.f32 %v739, %v742
    %vm744 = vweird.f32 %v738
    %vm745 = vweird.f32 %v739
    %vm746 = vmor %vm744, %vm745
    %v747 = vsel %vm746, %v739, %v743
    %v748 = vand.u32 2147483647, %v738
    %vm749 = vcmp.eq.f32.partialorder %v748, 8.507059e+37
    %v750 = vand.u32 %v738, 2147483648
    %v751 = vor.u32 1.1754944e-38, %v750
    %v752 = vsel %vm749, %v751, %v747
    %v753 = vmul.f32 1.0, %v752
    %v754 = vtanh.pop %v734
    %v755 = vmul.f32 %v753, %v695
    %757 = vrot.lane.b32.xlu0 %v754, 64
    %v758 = vpop.permute.xlu0 %757
    %v760 = vmul.f32 %v753, %v758
    %762 = vrot.lane.b32.xlu0 %v760, 32
    %v763 = vpop.permute.xlu0 %762
    %v765 = vadd.f32 %v755, %v763
    %v766 = vtanh.pop %v765
    %768 = vrot.lane.b32.xlu0 %v766, 64
    %v769 = vpop.permute.xlu0 %768
    %v771 = vmul.f32 %v753, %v769
    %v772 = vadd.f32 %v771, %v560
    %v773 = vmul.f32 %v772, 2.0
    %775 = vrot.lane.b32.xlu0 %v773, 32
    %v776 = vpop.permute.xlu0 %775
    %778 = vst.msk [vmem:[#allocation2 + $0x18] sm:$0xff] %vm496, %v776
    %780 = vrot.lane.b32.xlu0 %v771, 32
    %v781 = vpop.permute.xlu0 %780
    %v782 = vsel %vm496, %v781, 0
    %784 = vmatpush.msra.mxu0 0.0
    %785 = vmatpush.msra.mxu0 0.0
    %786 = vmatpush.msra.mxu0 0.0
    %787 = vmatpush.msra.mxu0 0.0
    %788 = vmatpush.msra.mxu0 0.0
    %789 = vmatpush.msra.mxu0 0.0
    %790 = vmatpush.msra.mxu0 0.0
    %791 = vmatpush.msra.mxu0 0.0
    %792 = vmatpush.msra.mxu0 0.0
    %793 = vmatpush.msra.mxu0 0.0
    %794 = vmatpush.msra.mxu0 0.0
    %795 = vmatpush.msra.mxu0 0.0
    %796 = vmatpush.msra.mxu0 %v495
    %797 = vmatpush.msra.mxu0 %v494
    %798 = vmatpush.msra.mxu0 %v493
    %799 = vmatpush.msra.mxu0 %v492
    %800 = vmatmul.f32.gmra.mxu0 %v782
    %v801 = vpop.f32.mrf.mxu0
    %v802 = vadd.f32 0.0, %v801
    %803 = vdwg.mxu0
    %v804 = vadd.f32 %v481, %v802
    %v805 = vxor.u32 %v804, 2147483648
    %v806 = vmul.f32 %v805, 1.442695
    %v807 = vpow.pop %v806
    %v808 = vadd.f32 %v807, 1.0
    %v809 = vrcp.pop %v808
    %v810 = vmul.f32 %v808, %v809
    %v811 = vsub.f32 1.0, %v810
    %v812 = vmul.f32 %v809, %v811
    %v813 = vadd.f32 %v809, %v812
    %vm814 = vweird.f32 %v808
    %vm815 = vweird.f32 %v809
    %vm816 = vmor %vm814, %vm815
    %v817 = vsel %vm816, %v809, %v813
    %v818 = vand.u32 2147483647, %v808
    %vm819 = vcmp.eq.f32.partialorder %v818, 8.507059e+37
    %v820 = vand.u32 %v808, 2147483648
    %v821 = vor.u32 1.1754944e-38, %v820
    %v822 = vsel %vm819, %v821, %v817
    %v823 = vmul.f32 1.0, %v822
    %v824 = vtanh.pop %v804
    %v825 = vmul.f32 %v823, %v765
    %827 = vrot.lane.b32.xlu0 %v824, 64
    %v828 = vpop.permute.xlu0 %827
    %v830 = vmul.f32 %v823, %v828
    %832 = vrot.lane.b32.xlu0 %v830, 32
    %v833 = vpop.permute.xlu0 %832
    %v835 = vadd.f32 %v825, %v833
    %v836 = vtanh.pop %v835
    %838 = vrot.lane.b32.xlu0 %v836, 64
    %v839 = vpop.permute.xlu0 %838
    %v841 = vmul.f32 %v823, %v839
    %v842 = vadd.f32 %v841, %v560
    %v843 = vmul.f32 %v842, 2.0
    %845 = vrot.lane.b32.xlu0 %v843, 32
    %v846 = vpop.permute.xlu0 %845
    %848 = vst.msk [vmem:[#allocation2 + $0x20] sm:$0xff] %vm496, %v846
    %850 = vrot.lane.b32.xlu0 %v841, 32
    %v851 = vpop.permute.xlu0 %850
    %v852 = vsel %vm496, %v851, 0
    %854 = vmatpush.msra.mxu0 0.0
    %855 = vmatpush.msra.mxu0 0.0
    %856 = vmatpush.msra.mxu0 0.0
    %857 = vmatpush.msra.mxu0 0.0
    %858 = vmatpush.msra.mxu0 0.0
    %859 = vmatpush.msra.mxu0 0.0
    %860 = vmatpush.msra.mxu0 0.0
    %861 = vmatpush.msra.mxu0 0.0
    %862 = vmatpush.msra.mxu0 0.0
    %863 = vmatpush.msra.mxu0 0.0
    %864 = vmatpush.msra.mxu0 0.0
    %865 = vmatpush.msra.mxu0 0.0
    %866 = vmatpush.msra.mxu0 %v495
    %867 = vmatpush.msra.mxu0 %v494
    %868 = vmatpush.msra.mxu0 %v493
    %869 = vmatpush.msra.mxu0 %v492
    %870 = vmatmul.f32.gmra.mxu0 %v852
    %v871 = vpop.f32.mrf.mxu0
    %v872 = vadd.f32 0.0, %v871
    %873 = vdwg.mxu0
    %v874 = vadd.f32 %v484, %v872
    %v875 = vxor.u32 %v874, 2147483648
    %v876 = vmul.f32 %v875, 1.442695
    %v877 = vpow.pop %v876
    %v878 = vadd.f32 %v877, 1.0
    %v879 = vrcp.pop %v878
    %v880 = vmul.f32 %v878, %v879
    %v881 = vsub.f32 1.0, %v880
    %v882 = vmul.f32 %v879, %v881
    %v883 = vadd.f32 %v879, %v882
    %vm884 = vweird.f32 %v878
    %vm885 = vweird.f32 %v879
    %vm886 = vmor %vm884, %vm885
    %v887 = vsel %vm886, %v879, %v883
    %v888 = vand.u32 2147483647, %v878
    %vm889 = vcmp.eq.f32.partialorder %v888, 8.507059e+37
    %v890 = vand.u32 %v878, 2147483648
    %v891 = vor.u32 1.1754944e-38, %v890
    %v892 = vsel %vm889, %v891, %v887
    %v893 = vmul.f32 1.0, %v892
    %v894 = vtanh.pop %v874
    %v895 = vmul.f32 %v893, %v835
    %897 = vrot.lane.b32.xlu0 %v894, 64
    %v898 = vpop.permute.xlu0 %897
    %v900 = vmul.f32 %v893, %v898
    %902 = vrot.lane.b32.xlu0 %v900, 32
    %v903 = vpop.permute.xlu0 %902
    %v905 = vadd.f32 %v895, %v903
    %v906 = vtanh.pop %v905
    %908 = vrot.lane.b32.xlu0 %v906, 64
    %v909 = vpop.permute.xlu0 %908
    %v911 = vmul.f32 %v893, %v909
    %v912 = vadd.f32 %v911, %v560
    %v913 = vmul.f32 %v912, 2.0
    %915 = vrot.lane.b32.xlu0 %v913, 32
    %v916 = vpop.permute.xlu0 %915
    %918 = vst.msk [vmem:[#allocation2 + $0x28] sm:$0xff] %vm496, %v916
    %920 = vrot.lane.b32.xlu0 %v911, 32
    %v921 = vpop.permute.xlu0 %920
    %v922 = vsel %vm496, %v921, 0
    %924 = vmatpush.msra.mxu0 0.0
    %925 = vmatpush.msra.mxu0 0.0
    %926 = vmatpush.msra.mxu0 0.0
    %927 = vmatpush.msra.mxu0 0.0
    %928 = vmatpush.msra.mxu0 0.0
    %929 = vmatpush.msra.mxu0 0.0
    %930 = vmatpush.msra.mxu0 0.0
    %931 = vmatpush.msra.mxu0 0.0
    %932 = vmatpush.msra.mxu0 0.0
    %933 = vmatpush.msra.mxu0 0.0
    %934 = vmatpush.msra.mxu0 0.0
    %935 = vmatpush.msra.mxu0 0.0
    %936 = vmatpush.msra.mxu0 %v495
    %937 = vmatpush.msra.mxu0 %v494
    %938 = vmatpush.msra.mxu0 %v493
    %939 = vmatpush.msra.mxu0 %v492
    %940 = vmatmul.f32.gmra.mxu0 %v922
    %v941 = vpop.f32.mrf.mxu0
    %v942 = vadd.f32 0.0, %v941
    %943 = vdwg.mxu0
    %v944 = vadd.f32 %v487, %v942
    %v945 = vxor.u32 %v944, 2147483648
    %v946 = vmul.f32 %v945, 1.442695
    %v947 = vpow.pop %v946
    %v948 = vadd.f32 %v947, 1.0
    %v949 = vrcp.pop %v948
    %v950 = vmul.f32 %v948, %v949
    %v951 = vsub.f32 1.0, %v950
    %v952 = vmul.f32 %v949, %v951
    %v953 = vadd.f32 %v949, %v952
    %vm954 = vweird.f32 %v948
    %vm955 = vweird.f32 %v949
    %vm956 = vmor %vm954, %vm955
    %v957 = vsel %vm956, %v949, %v953
    %v958 = vand.u32 2147483647, %v948
    %vm959 = vcmp.eq.f32.partialorder %v958, 8.507059e+37
    %v960 = vand.u32 %v948, 2147483648
    %v961 = vor.u32 1.1754944e-38, %v960
    %v962 = vsel %vm959, %v961, %v957
    %v963 = vmul.f32 1.0, %v962
    %v964 = vtanh.pop %v944
    %v965 = vmul.f32 %v963, %v905
    %967 = vrot.lane.b32.xlu0 %v964, 64
    %v968 = vpop.permute.xlu0 %967
    %v970 = vmul.f32 %v963, %v968
    %972 = vrot.lane.b32.xlu0 %v970, 32
    %v973 = vpop.permute.xlu0 %972
    %v975 = vadd.f32 %v965, %v973
    %v976 = vtanh.pop %v975
    %978 = vrot.lane.b32.xlu0 %v976, 64
    %v979 = vpop.permute.xlu0 %978
    %v981 = vmul.f32 %v963, %v979
    %v982 = vadd.f32 %v981, %v560
    %v983 = vmul.f32 %v982, 2.0
    %985 = vrot.lane.b32.xlu0 %v983, 32
    %v986 = vpop.permute.xlu0 %985
    %988 = vst.msk [vmem:[#allocation2 + $0x30] sm:$0xff] %vm496, %v986
    %990 = vrot.lane.b32.xlu0 %v981, 32
    %v991 = vpop.permute.xlu0 %990
    %v992 = vsel %vm496, %v991, 0
    %994 = vmatpush.msra.mxu0 0.0
    %995 = vmatpush.msra.mxu0 0.0
    %996 = vmatpush.msra.mxu0 0.0
    %997 = vmatpush.msra.mxu0 0.0
    %998 = vmatpush.msra.mxu0 0.0
    %999 = vmatpush.msra.mxu0 0.0
    %1000 = vmatpush.msra.mxu0 0.0
    %1001 = vmatpush.msra.mxu0 0.0
    %1002 = vmatpush.msra.mxu0 0.0
    %1003 = vmatpush.msra.mxu0 0.0
    %1004 = vmatpush.msra.mxu0 0.0
    %1005 = vmatpush.msra.mxu0 0.0
    %1006 = vmatpush.msra.mxu0 %v495
    %1007 = vmatpush.msra.mxu0 %v494
    %1008 = vmatpush.msra.mxu0 %v493
    %1009 = vmatpush.msra.mxu0 %v492
    %1010 = vmatmul.f32.gmra.mxu0 %v992
    %v1011 = vpop.f32.mrf.mxu0
    %v1012 = vadd.f32 0.0, %v1011
    %1013 = vdwg.mxu0
    %v1014 = vadd.f32 %v490, %v1012
    %v1015 = vxor.u32 %v1014, 2147483648
    %v1016 = vmul.f32 %v1015, 1.442695
    %v1017 = vpow.pop %v1016
    %v1018 = vadd.f32 %v1017, 1.0
    %v1019 = vrcp.pop %v1018
    %v1020 = vmul.f32 %v1018, %v1019
    %v1021 = vsub.f32 1.0, %v1020
    %v1022 = vmul.f32 %v1019, %v1021
    %v1023 = vadd.f32 %v1019, %v1022
    %vm1024 = vweird.f32 %v1018
    %vm1025 = vweird.f32 %v1019
    %vm1026 = vmor %vm1024, %vm1025
    %v1027 = vsel %vm1026, %v1019, %v1023
    %v1028 = vand.u32 2147483647, %v1018
    %vm1029 = vcmp.eq.f32.partialorder %v1028, 8.507059e+37
    %v1030 = vand.u32 %v1018, 2147483648
    %v1031 = vor.u32 1.1754944e-38, %v1030
    %v1032 = vsel %vm1029, %v1031, %v1027
    %v1033 = vmul.f32 1.0, %v1032
    %v1034 = vtanh.pop %v1014
    %v1035 = vmul.f32 %v1033, %v975
    %1037 = vrot.lane.b32.xlu0 %v1034, 64
    %v1038 = vpop.permute.xlu0 %1037
    %v1040 = vmul.f32 %v1033, %v1038
    %1042 = vrot.lane.b32.xlu0 %v1040, 32
    %v1043 = vpop.permute.xlu0 %1042
    %v1045 = vadd.f32 %v1035, %v1043
    %v1046 = vtanh.pop %v1045
    %1048 = vrot.lane.b32.xlu0 %v1046, 64
    %v1049 = vpop.permute.xlu0 %1048
    %v1051 = vmul.f32 %v1033, %v1049
    %v1052 = vadd.f32 %v1051, %v560
    %v1053 = vmul.f32 %v1052, 2.0
    %1055 = vrot.lane.b32.xlu0 %v1053, 32
    %v1056 = vpop.permute.xlu0 %1055
    %1058 = vst.msk [vmem:[#allocation2 + $0x38] sm:$0xff] %vm496, %v1056
    %1060 = vrot.lane.b32.xlu0 %v1051, 32
    %v1061 = vpop.permute.xlu0 %1060
    %1063 = vst.msk [vmem:[#allocation7] sm:$0xff] %vm496, %v1061
    %1065 = vrot.lane.b32.xlu0 %v1045, 96
    %v1066 = vpop.permute.xlu0 %1065
    %1068 = vst.msk [vmem:[#allocation9] sm:$0xff] %vm496, %v1066
    %v1069 = vld [vmem:[#allocation3 + $0x110] sm:$0xff]
    %v1070 = vld [vmem:[#allocation3 + $0x118] sm:$0xff]
    %v1071 = vld [vmem:[#allocation3 + $0x120] sm:$0xff]
    %v1072 = vld [vmem:[#allocation3 + $0x128] sm:$0xff]
    %v1073 = vld [vmem:[#allocation2] sm:$0xff]
    %v1074 = vld [vmem:[#allocation2 + $0x8] sm:$0xff]
    %v1075 = vld [vmem:[#allocation2 + $0x10] sm:$0xff]
    %v1076 = vld [vmem:[#allocation2 + $0x18] sm:$0xff]
    %v1077 = vld [vmem:[#allocation2 + $0x20] sm:$0xff]
    %v1078 = vld [vmem:[#allocation2 + $0x28] sm:$0xff]
    %v1079 = vld [vmem:[#allocation2 + $0x30] sm:$0xff]
    %v1080 = vld [vmem:[#allocation2 + $0x38] sm:$0xff]
    %v1081 = vperm.slane %v43, 0
    %v1083 = vsel %vm496, %v1073, 0
    %v1086 = vsel %vm496, %v1074, 0
    %v1089 = vsel %vm496, %v1075, 0
    %v1092 = vsel %vm496, %v1076, 0
    %v1095 = vsel %vm496, %v1077, 0
    %v1098 = vsel %vm496, %v1078, 0
    %v1101 = vsel %vm496, %v1079, 0
    %v1104 = vsel %vm496, %v1080, 0
    %1106 = vmatpush.msra.mxu0 0.0
    %1107 = vmatpush.msra.mxu0 0.0
    %1108 = vmatpush.msra.mxu0 0.0
    %1109 = vmatpush.msra.mxu0 0.0
    %1110 = vmatpush.msra.mxu0 0.0
    %1111 = vmatpush.msra.mxu0 0.0
    %1112 = vmatpush.msra.mxu0 0.0
    %1113 = vmatpush.msra.mxu0 0.0
    %1114 = vmatpush.msra.mxu0 0.0
    %1115 = vmatpush.msra.mxu0 0.0
    %1116 = vmatpush.msra.mxu0 0.0
    %1117 = vmatpush.msra.mxu0 0.0
    %1118 = vmatpush.msra.mxu0 %v1072
    %1119 = vmatpush.msra.mxu0 %v1071
    %1120 = vmatpush.msra.mxu0 %v1070
    %1121 = vmatpush.msra.mxu0 %v1069
    %1122 = vmatmul.f32.gmra.mxu0 %v1083
    %v1123 = vpop.f32.mrf.mxu0
    %v1124 = vadd.f32 %v1081, %v1123
    %1125 = vmatmul.f32.gmra.mxu0 %v1086
    %v1126 = vpop.f32.mrf.mxu0
    %v1127 = vadd.f32 %v1081, %v1126
    %1128 = vmatmul.f32.gmra.mxu0 %v1089
    %v1129 = vpop.f32.mrf.mxu0
    %v1130 = vadd.f32 %v1081, %v1129
    %1131 = vmatmul.f32.gmra.mxu0 %v1092
    %v1132 = vpop.f32.mrf.mxu0
    %v1133 = vadd.f32 %v1081, %v1132
    %1134 = vmatmul.f32.gmra.mxu0 %v1095
    %v1135 = vpop.f32.mrf.mxu0
    %v1136 = vadd.f32 %v1081, %v1135
    %1137 = vmatmul.f32.gmra.mxu0 %v1098
    %v1138 = vpop.f32.mrf.mxu0
    %v1139 = vadd.f32 %v1081, %v1138
    %1140 = vmatmul.f32.gmra.mxu0 %v1101
    %v1141 = vpop.f32.mrf.mxu0
    %v1142 = vadd.f32 %v1081, %v1141
    %1143 = vmatmul.f32.gmra.mxu0 %v1104
    %v1144 = vpop.f32.mrf.mxu0
    %v1145 = vadd.f32 %v1081, %v1144
    %1146 = vdwg.mxu0
    %vm1147 = vcmp.ge.f32.partialorder %v1124, 0.0
    %vm1148 = vcmp.ge.f32.partialorder %v1127, 0.0
    %vm1149 = vcmp.ge.f32.partialorder %v1130, 0.0
    %vm1150 = vcmp.ge.f32.partialorder %v1133, 0.0
    %vm1151 = vcmp.ge.f32.partialorder %v1136, 0.0
    %vm1152 = vcmp.ge.f32.partialorder %v1139, 0.0
    %vm1153 = vcmp.ge.f32.partialorder %v1142, 0.0
    %vm1154 = vcmp.ge.f32.partialorder %v1145, 0.0
    %v1155 = vmul.f32 %v1124, 0.01
    %v1156 = vmul.f32 %v1127, 0.01
    %v1157 = vmul.f32 %v1130, 0.01
    %v1158 = vmul.f32 %v1133, 0.01
    %v1159 = vmul.f32 %v1136, 0.01
    %v1160 = vmul.f32 %v1139, 0.01
    %v1161 = vmul.f32 %v1142, 0.01
    %v1162 = vmul.f32 %v1145, 0.01
    %v1163 = vsel %vm1147, %v1124, %v1155
    %v1164 = vsel %vm1148, %v1127, %v1156
    %v1165 = vsel %vm1149, %v1130, %v1157
    %v1166 = vsel %vm1150, %v1133, %v1158
    %v1167 = vsel %vm1151, %v1136, %v1159
    %v1168 = vsel %vm1152, %v1139, %v1160
    %v1169 = vsel %vm1153, %v1142, %v1161
    %v1170 = vsel %vm1154, %v1145, %v1162
    %v1171 = vperm.slane %v44, 0
    %v1172 = vmul.f32 %v1163, %v1171
    %v1173 = vmul.f32 %v1164, %v1171
    %v1174 = vmul.f32 %v1165, %v1171
    %v1175 = vmul.f32 %v1166, %v1171
    %v1176 = vmul.f32 %v1167, %v1171
    %v1177 = vmul.f32 %v1168, %v1171
    %v1178 = vmul.f32 %v1169, %v1171
    %v1179 = vmul.f32 %v1170, %v1171
    %v1180 = vsel %vm496, %v1172, 0.0
    %1181 = vadd.xlane.f32.xlu0 %v1180
    %v1182 = vpop.xlane.xlu0 %1181
    %v1183 = vsel %vm496, %v1173, 0.0
    %1184 = vadd.xlane.f32.xlu0 %v1183
    %v1185 = vpop.xlane.xlu0 %1184
    %v1186 = vsel %vm496, %v1174, 0.0
    %1187 = vadd.xlane.f32.xlu0 %v1186
    %v1188 = vpop.xlane.xlu0 %1187
    %v1189 = vsel %vm496, %v1175, 0.0
    %1190 = vadd.xlane.f32.xlu0 %v1189
    %v1191 = vpop.xlane.xlu0 %1190
    %v1192 = vsel %vm496, %v1176, 0.0
    %1193 = vadd.xlane.f32.xlu0 %v1192
    %v1194 = vpop.xlane.xlu0 %1193
    %v1195 = vsel %vm496, %v1177, 0.0
    %1196 = vadd.xlane.f32.xlu0 %v1195
    %v1197 = vpop.xlane.xlu0 %1196
    %v1198 = vsel %vm496, %v1178, 0.0
    %1199 = vadd.xlane.f32.xlu0 %v1198
    %v1200 = vpop.xlane.xlu0 %1199
    %v1201 = vsel %vm496, %v1179, 0.0
    %1202 = vadd.xlane.f32.xlu0 %v1201
    %v1203 = vpop.xlane.xlu0 %1202
    %vm1204 = vcmask 7168
    %v1205 = vsel %vm1204, %v1182, %v1185
    %vm1206 = vcmask 15360
    %v1207 = vsel %vm1206, %v1205, %v1188
    %vm1208 = vcmask 23552
    %v1209 = vsel %vm1208, %v1207, %v1191
    %vm1210 = vcmask 31744
    %v1211 = vsel %vm1210, %v1209, %v1194
    %vm1212 = vcmask 39936
    %v1213 = vsel %vm1212, %v1211, %v1197
    %vm1214 = vcmask 48128
    %v1215 = vsel %vm1214, %v1213, %v1200
    %vm1216 = vcmask 56320
    %v1217 = vsel %vm1216, %v1215, %v1203
    %s1219 = vtos %v45
    %v1220 = vstv %s1219
    %v1222 = vadd.f32 %v1217, %v1220
    %vm1223 = vcmask 64512
    %1224 = vst.msk [vmem:[#allocation6] sm:$0xff] %vm1223, %v1222
    // Predicated region
    $region22: #{forward.1} parent=1 // pred_check
      _
    $region23: #{forward.1} parent=1 // pred_check_branch
      %1226 = sbr.rel (0) target = $region25
    $region24: #{forward.1} parent=1 // pred_region
      %1228 = vsyncadd [#allocation5], 0
      %s1230 = sshll.u32 [#allocation6], 4
      %s1231 = int_to_ptr.vmem [resolvable:$true] %s1230
      %s1232 = sshll.u32 %s4, 4
      %s1233 = int_to_ptr.hbm [resolvable:$true] %s1232
      %1235 = dma.vmem_to_hbm [thread:$0]  %s1231, 128, %s1233, [#allocation5]
    $region25: #{forward.1} parent=1 // pred_fallthru
      _
    // Predicated region
    $region26: #{forward.1} parent=1 // pred_check
      _
    $region27: #{forward.1} parent=1 // pred_check_branch
      %1237 = sbr.rel (0) target = $region29
    $region28: #{forward.1} parent=1 // pred_region
      %1239 = vsyncadd [#allocation8], 0
      %s1241 = sshll.u32 [#allocation7], 4
      %s1242 = int_to_ptr.vmem [resolvable:$true] %s1241
      %s1243 = sshll.u32 %s5, 4
      %s1244 = int_to_ptr.hbm [resolvable:$true] %s1243
      %1246 = dma.vmem_to_hbm [thread:$0]  %s1242, 128, %s1244, [#allocation8]
    $region29: #{forward.1} parent=1 // pred_fallthru
      _
    // Predicated region
    $region30: #{forward.1} parent=1 // pred_check
      _
    $region31: #{forward.1} parent=1 // pred_check_branch
      %1248 = sbr.rel (0) target = $region33
    $region32: #{forward.1} parent=1 // pred_region
      %1250 = vsyncadd [#allocation8], 0
      %s1252 = sshll.u32 [#allocation9], 4
      %s1253 = int_to_ptr.vmem [resolvable:$true] %s1252
      %s1254 = sshll.u32 %s6, 4
      %s1255 = int_to_ptr.hbm [resolvable:$true] %s1254
      %1257 = dma.vmem_to_hbm [thread:$0]  %s1253, 128, %s1255, [#allocation8]
    $region33: #{forward.1} parent=1 // pred_fallthru
      _
    // Predicated region
    $region34: #{forward.1} parent=1 // pred_check
      _
    $region35: #{forward.1} parent=1 // pred_check_branch
      %1259 = sbr.rel (0) target = $region37
    $region36: #{forward.1} parent=1 // pred_region
      %1261 = dma.done [#allocation5], 128
    $region37: #{forward.1} parent=1 // pred_fallthru
      _
    // Predicated region
    $region38: #{forward.1} parent=1 // pred_check
      _
    $region39: #{forward.1} parent=1 // pred_check_branch
      %1263 = sbr.rel (0) target = $region41
    $region40: #{forward.1} parent=1 // pred_region
      %1265 = dma.done [#allocation8], 128
    $region41: #{forward.1} parent=1 // pred_fallthru
      _
    // Predicated region
    $region42: #{forward.1} parent=1 // pred_check
      _
    $region43: #{forward.1} parent=1 // pred_check_branch
      %1267 = sbr.rel (0) target = $region45
    $region44: #{forward.1} parent=1 // pred_region
      %1269 = dma.done [#allocation8], 128
    $region45: #{forward.1} parent=1 // pred_fallthru
      _
    %1270 = vsyncpa [#allocation4], 1
    %1271 = vsyncpa [#allocation5], 1
    %1272 = vsyncpa [#allocation8], 1

</llo_original>
